<compile_context>
chip_gen: v7x
topology: tpu7x:2x2x1
jax: 0.10.0
libtpu: 0.0.40
codegen_flags: <defaults>
</compile_context>

<pallas_src>
import functools

import jax
import jax.numpy as jnp
from jax.experimental import pallas as pl
from jax.experimental.pallas import tpu as pltpu

# ---------------- model hyper-params (small, synthetic) ----------------
PATCH = 4      # patch size of the "vision encoder"
EMBED = 128    # token embedding dim (lane friendly)
HIDDEN = 256   # MLP hidden dim
NUM_MASKS = 3  # SAM returns 3 candidate masks per prompt (post-processing keeps mask 0)


# ---------------- fused Pallas kernel (the whole hot path) ----------------

def _fused_sam_kernel(x_ref, prompt_ref, wp_ref, bp_ref, w1_ref, b1_ref,
                      w2_ref, b2_ref, wm_ref, bm_ref, rye_ref, rxt_ref, o_ref):
    """Per (batch, token-tile) step.

    x_ref      : (TM, KPAD)  bf16   zero-padded patchified pixels
    prompt_ref : (1, D)      f32    per-batch prompt bias
    wp/w1/w2   : bf16 weight matrices (VMEM-resident across the grid)
    bp/b1/b2   : (1, D)/(1, HID)/(1, D) f32 biases
    wm_ref     : (1, D)      f32    mask-0 head row vector
    bm_ref     : (1, 1)      f32    mask-0 head bias
    rye_ref    : (H, TM)     f32    expanded row-resize matrix slice for this tile
    rxt_ref    : (TM, W)     f32    tiled column-resize matrix slice for this tile
    o_ref      : (H, W)      f32    resized mask, resident accumulator across token tiles
    """
    t = pl.program_id(1)

    @pl.when(t == 0)
    def _():
        o_ref[...] = jnp.zeros_like(o_ref)

    # --- vision encoder: patch embedding (bf16 MXU, f32 accumulate) + prompt bias ---
    tokens = (jnp.dot(x_ref[...], wp_ref[...], preferred_element_type=jnp.float32)
              + bp_ref[...] + prompt_ref[...])                              # (TM, D) f32

    # --- mask decoder: MLP block with residual (elementwise math stays f32) ---
    h = jnp.dot(tokens.astype(jnp.bfloat16), w1_ref[...],
                preferred_element_type=jnp.float32) + b1_ref[...]
    h = jax.nn.gelu(h)                                                      # tanh approx
    y = tokens + jnp.dot(h.astype(jnp.bfloat16), w2_ref[...],
                         preferred_element_type=jnp.float32) + b2_ref[...]  # (TM, D)

    # --- mask-0 logits only (the mask kept by the module's post-processing) ---
    v = jnp.sum(y * wm_ref[...], axis=-1, keepdims=True) + bm_ref[...]      # (TM, 1)

    # --- fused separable bilinear resize, accumulated over token tiles ---
    # out[i, j] = sum_t RyE[i, t] * v[t] * RxT_tiled[t, j]
    o_ref[...] += jnp.dot(rye_ref[...], v * rxt_ref[...],
                          preferred_element_type=jnp.float32)


def _choose_token_tile(T):
    """Token-tile size: full T when small, otherwise a lane-friendly divisor."""
    if T <= 512:
        return T
    for tm in (512, 256, 128):
        if T % tm == 0:
            return tm
    return T  # fallback: untiled (full-extent blocks are always legal)


def fused_sam_forward(x_pad, prompt, wp, bp, w1, b1, w2, b2, wm_row, bm,
                      rye, rxt_t, out_h, out_w):
    """x_pad (B, T, KPAD) bf16 -> resized mask (B, 1, H, W) f32, one pallas_call."""
    B, T, KPAD = x_pad.shape
    D = wp.shape[1]
    HID = w1.shape[1]
    TM = _choose_token_tile(T)
    assert T % TM == 0
    n_t = T // TM

    resident = lambda b, t: (0, 0)  # weights / biases stay in VMEM across the grid

    return pl.pallas_call(
        _fused_sam_kernel,
        out_shape=jax.ShapeDtypeStruct((B, 1, out_h, out_w), jnp.float32),
        grid=(B, n_t),
        in_specs=[
            pl.BlockSpec((pl.Squeezed(), TM, KPAD), lambda b, t: (b, t, 0)),   # x
            pl.BlockSpec((pl.Squeezed(), 1, D), lambda b, t: (b, 0, 0)),       # prompt
            pl.BlockSpec((KPAD, D), resident),                                 # w_patch
            pl.BlockSpec((1, D), resident),                                    # b_patch
            pl.BlockSpec((D, HID), resident),                                  # w1
            pl.BlockSpec((1, HID), resident),                                  # b1
            pl.BlockSpec((HID, D), resident),                                  # w2
            pl.BlockSpec((1, D), resident),                                    # b2
            pl.BlockSpec((1, D), resident),                                    # w_mask0 row
            pl.BlockSpec((1, 1), resident),                                    # b_mask0
            pl.BlockSpec((out_h, TM), lambda b, t: (0, t)),                    # RyE slice
            pl.BlockSpec((TM, out_w), lambda b, t: (t, 0)),                    # RxT slice
        ],
        out_specs=pl.BlockSpec((pl.Squeezed(), pl.Squeezed(), out_h, out_w),
                               lambda b, t: (b, 0, 0, 0)),
        compiler_params=pltpu.CompilerParams(
            dimension_semantics=("parallel", "arbitrary"),
            vmem_limit_bytes=32 * 1024 * 1024,
        ),
    )(x_pad, prompt, wp, bp, w1, b1, w2, b2, wm_row, bm, rye, rxt_t)


# ---------------- glue: interpolation matrices, params, forward ----------------

def bilinear_matrix(out_size, in_size):
    """PyTorch F.interpolate(mode='bilinear', align_corners=False) as a (out, in) matrix."""
    scale = in_size / out_size
    dst = jnp.arange(out_size, dtype=jnp.float32)
    src = (dst + 0.5) * scale - 0.5
    src = jnp.maximum(src, 0.0)                      # PyTorch clamps negative src index to 0
    x0 = jnp.floor(src)
    w1 = src - x0
    w0 = 1.0 - w1
    x0i = jnp.clip(x0.astype(jnp.int32), 0, in_size - 1)
    x1i = jnp.clip(x0i + 1, 0, in_size - 1)
    oh0 = jax.nn.one_hot(x0i, in_size, dtype=jnp.float32)
    oh1 = jax.nn.one_hot(x1i, in_size, dtype=jnp.float32)
    return oh0 * w0[:, None] + oh1 * w1[:, None]


def init_params(key, in_channels):
    K = in_channels * PATCH * PATCH
    ks = jax.random.split(key, 8)
    s = 0.02
    return {
        "w_patch": s * jax.random.normal(ks[0], (K, EMBED), jnp.float32),
        "b_patch": jnp.zeros((1, EMBED), jnp.float32),
        "w1": s * jax.random.normal(ks[1], (EMBED, HIDDEN), jnp.float32),
        "b1": jnp.zeros((1, HIDDEN), jnp.float32),
        "w2": s * jax.random.normal(ks[2], (HIDDEN, EMBED), jnp.float32),
        "b2": jnp.zeros((1, EMBED), jnp.float32),
        "w_mask": s * jax.random.normal(ks[3], (EMBED, NUM_MASKS), jnp.float32),
        "b_mask": jnp.zeros((1, NUM_MASKS), jnp.float32),
        "w_point": s * jax.random.normal(ks[4], (2, EMBED), jnp.float32),
        "label_emb": s * jax.random.normal(ks[5], (2, EMBED), jnp.float32),
    }


def sam_finetuner_forward(params, images, points=None, labels=None):
    """Mirrors SAMFineTuner.forward: images (B,C,H,W) -> masks (B,1,H,W)."""
    B, C, H, W = images.shape
    assert H % PATCH == 0 and W % PATCH == 0
    Hg, Wg = H // PATCH, W // PATCH
    T = Hg * Wg
    K = C * PATCH * PATCH
    KPAD = ((K + 127) // 128) * 128   # dense lanes / full MXU K

    # --- patchify + zero-pad the contraction dim (XLA glue) ---
    x = images.reshape(B, C, Hg, PATCH, Wg, PATCH)
    x = x.transpose(0, 2, 4, 1, 3, 5).reshape(B, T, K)       # token t = gy*Wg + gx
    x_pad = jnp.pad(x, ((0, 0), (0, 0), (0, KPAD - K))).astype(jnp.bfloat16)

    # --- prompt encoder: point + label embeddings (tiny, stays in XLA) ---
    prompt = jnp.zeros((B, 1, EMBED), jnp.float32)
    if points is not None:
        pts = points.reshape(B, -1, 2).astype(jnp.float32)
        coords = pts / jnp.array([W, H], jnp.float32)                      # normalize [0,1]
        pe = coords @ params["w_point"]                                    # (B, N, D)
        if labels is not None:
            lab = labels.reshape(B, -1)
            pe = pe + jax.nn.one_hot(lab, 2, dtype=jnp.float32) @ params["label_emb"]
        prompt = pe.mean(axis=1, keepdims=True)                            # (B, 1, D)

    # --- weights: bf16 at the MXU, mask head restricted to mask 0 ---
    wp = jnp.pad(params["w_patch"], ((0, KPAD - K), (0, 0))).astype(jnp.bfloat16)
    w1 = params["w1"].astype(jnp.bfloat16)
    w2 = params["w2"].astype(jnp.bfloat16)
    wm_row = params["w_mask"][:, :1].T                                     # (1, EMBED)
    bm = params["b_mask"][:, :1].reshape(1, 1)                             # (1, 1)
    # The module's post-processing (pred_masks.dim()==5 and shape[2]==3) keeps only
    # mask 0, so the other two mask columns are never computed.

    # --- expanded separable bilinear-resize matrices (align_corners=False) ---
    ry = bilinear_matrix(H, Hg)                                            # (H, Hg)
    rxt = bilinear_matrix(W, Wg).T                                         # (Wg, W)
    rye = jnp.repeat(ry, Wg, axis=1)                                       # (H, T): RyE[i,t]=Ry[i,t//Wg]
    rxt_t = jnp.tile(rxt, (Hg, 1))                                         # (T, W): [t,j]=RxT[t%Wg,j]

    # --- single fused Pallas kernel: embed + MLP + mask-0 head + resize ---
    return fused_sam_forward(x_pad, prompt, wp, params["b_patch"],
                             w1, params["b1"], w2, params["b2"],
                             wm_row, bm, rye, rxt_t, H, W)                 # (B, 1, H, W)


if __name__ == "__main__":
    B, C, H, W, N = 2, 3, 32, 32, 4

    key = jax.random.PRNGKey(0)
    k_img, k_pts = jax.random.split(key)
    images = jax.random.normal(k_img, (B, C, H, W), jnp.float32)
    points = jax.random.uniform(k_pts, (B, 1, N, 2), jnp.float32, 0.0, float(W))
    labels = jnp.ones((B, 1, N), jnp.int32)

    params = init_params(jax.random.PRNGKey(42), C)

    fwd = jax.jit(functools.partial(sam_finetuner_forward, params))
    out = fwd(images, points, labels)
    out = jax.block_until_ready(out)

    assert out.shape == (B, 1, H, W), out.shape
    assert out.dtype == jnp.float32
    assert bool(jnp.all(jnp.isfinite(out)))
    print("KERNEL_OK")
</pallas_src>

<mosaic_0001>
module attributes {stable_mosaic.version = 11 : i64} {
  func.func @_fused_sam_kernel(%arg0: i32, %arg1: i32, %arg2: memref<1x64x128xbf16, #tpu.memory_space<vmem>>, %arg3: memref<1x1x128xf32, #tpu.memory_space<vmem>>, %arg4: memref<128x128xbf16, #tpu.memory_space<vmem>>, %arg5: memref<1x128xf32, #tpu.memory_space<vmem>>, %arg6: memref<128x256xbf16, #tpu.memory_space<vmem>>, %arg7: memref<1x256xf32, #tpu.memory_space<vmem>>, %arg8: memref<256x128xbf16, #tpu.memory_space<vmem>>, %arg9: memref<1x128xf32, #tpu.memory_space<vmem>>, %arg10: memref<1x128xf32, #tpu.memory_space<vmem>>, %arg11: memref<1x1xf32, #tpu.memory_space<vmem>>, %arg12: memref<32x64xf32, #tpu.memory_space<vmem>>, %arg13: memref<64x32xf32, #tpu.memory_space<vmem>>, %arg14: memref<1x1x32x32xf32, #tpu.memory_space<vmem>>) attributes {dimension_semantics = [#tpu.dimension_semantics<parallel>, #tpu.dimension_semantics<arbitrary>], iteration_bounds = array<i64: 2, 1>, scalar_prefetch = 0 : i64, scratch_operands = 0 : i64, tpu.core_type = #tpu.core_type<tc>, window_params = [{transform_indices = @transform_0, window_bounds = array<i64: 1, 64, 128>}, {transform_indices = @transform_1, window_bounds = array<i64: 1, 1, 128>}, {pipeline_mode = #tpu.pipeline_mode<synchronous>, transform_indices = @transform_2, window_bounds = array<i64: 128, 128>}, {pipeline_mode = #tpu.pipeline_mode<synchronous>, transform_indices = @transform_3, window_bounds = array<i64: 1, 128>}, {pipeline_mode = #tpu.pipeline_mode<synchronous>, transform_indices = @transform_4, window_bounds = array<i64: 128, 256>}, {pipeline_mode = #tpu.pipeline_mode<synchronous>, transform_indices = @transform_5, window_bounds = array<i64: 1, 256>}, {pipeline_mode = #tpu.pipeline_mode<synchronous>, transform_indices = @transform_6, window_bounds = array<i64: 256, 128>}, {pipeline_mode = #tpu.pipeline_mode<synchronous>, transform_indices = @transform_7, window_bounds = array<i64: 1, 128>}, {pipeline_mode = #tpu.pipeline_mode<synchronous>, transform_indices = @transform_8, window_bounds = array<i64: 1, 128>}, {pipeline_mode = #tpu.pipeline_mode<synchronous>, transform_indices = @transform_9, window_bounds = array<i64: 1, 1>}, {transform_indices = @transform_10, window_bounds = array<i64: 32, 64>}, {transform_indices = @transform_11, window_bounds = array<i64: 64, 32>}, {transform_indices = @transform_12, window_bounds = array<i64: 1, 1, 32, 32>}]} {
    %c0_i32 = arith.constant 0 : i32
    %0 = arith.cmpi eq, %arg1, %c0_i32 : i32
    %1 = arith.extui %0 : i1 to i32
    %c0_i32_0 = arith.constant 0 : i32
    %2 = arith.cmpi ne, %1, %c0_i32_0 : i32
    scf.if %2 {
      %cst_42 = arith.constant 0.000000e+00 : f32
      %59 = vector.broadcast %cst_42 : f32 to vector<32x32xf32>
      %c0_43 = arith.constant 0 : index
      %c0_44 = arith.constant 0 : index
      %c0_45 = arith.constant 0 : index
      %c0_46 = arith.constant 0 : index
      %60 = vector.load %arg14[%c0_43, %c0_44, %c0_45, %c0_46] : memref<1x1x32x32xf32, #tpu.memory_space<vmem>>, vector<1x1x32x32xf32>
      %61 = vector.shape_cast %60 : vector<1x1x32x32xf32> to vector<32x32xf32>
      %62 = vector.shape_cast %59 : vector<32x32xf32> to vector<1x1x32x32xf32>
      tpu.vector_store %arg14[%c0_43, %c0_44, %c0_45, %c0_46], %62 {strides = array<i32>} : memref<1x1x32x32xf32, #tpu.memory_space<vmem>>, vector<1x1x32x32xf32>,
    } else {
    }
    %c0 = arith.constant 0 : index
    %c0_1 = arith.constant 0 : index
    %c0_2 = arith.constant 0 : index
    %3 = vector.load %arg2[%c0, %c0_1, %c0_2] : memref<1x64x128xbf16, #tpu.memory_space<vmem>>, vector<1x64x128xbf16>
    %4 = vector.shape_cast %3 : vector<1x64x128xbf16> to vector<64x128xbf16>
    %c0_3 = arith.constant 0 : index
    %c0_4 = arith.constant 0 : index
    %5 = vector.load %arg4[%c0_3, %c0_4] : memref<128x128xbf16, #tpu.memory_space<vmem>>, vector<128x128xbf16>
    %cst = arith.constant dense<0.000000e+00> : vector<64x128xf32>
    %6 = tpu.matmul %4, %5, %cst {dimension_numbers = #tpu.dot_dimension_numbers<[1], [0], [0], [1], [0, 0, 1, 1], [], []>} : vector<64x128xbf16>, vector<128x128xbf16>, vector<64x128xf32> -> vector<64x128xf32>
    %c0_5 = arith.constant 0 : index
    %c0_6 = arith.constant 0 : index
    %7 = vector.load %arg5[%c0_5, %c0_6] : memref<1x128xf32, #tpu.memory_space<vmem>>, vector<1x128xf32>
    %8 = vector.broadcast %7 : vector<1x128xf32> to vector<64x128xf32>
    %9 = arith.addf %6, %8 : vector<64x128xf32>
    %c0_7 = arith.constant 0 : index
    %c0_8 = arith.constant 0 : index
    %c0_9 = arith.constant 0 : index
    %10 = vector.load %arg3[%c0_7, %c0_8, %c0_9] : memref<1x1x128xf32, #tpu.memory_space<vmem>>, vector<1x1x128xf32>
    %11 = vector.shape_cast %10 : vector<1x1x128xf32> to vector<1x128xf32>
    %12 = vector.broadcast %11 : vector<1x128xf32> to vector<64x128xf32>
    %13 = arith.addf %9, %12 : vector<64x128xf32>
    %14 = arith.truncf %13 : vector<64x128xf32> to vector<64x128xbf16>
    %c0_10 = arith.constant 0 : index
    %c0_11 = arith.constant 0 : index
    %15 = vector.load %arg6[%c0_10, %c0_11] : memref<128x256xbf16, #tpu.memory_space<vmem>>, vector<128x256xbf16>
    %cst_12 = arith.constant dense<0.000000e+00> : vector<64x256xf32>
    %16 = tpu.matmul %14, %15, %cst_12 {dimension_numbers = #tpu.dot_dimension_numbers<[1], [0], [0], [1], [0, 0, 1, 1], [], []>} : vector<64x128xbf16>, vector<128x256xbf16>, vector<64x256xf32> -> vector<64x256xf32>
    %c0_13 = arith.constant 0 : index
    %c0_14 = arith.constant 0 : index
    %17 = vector.load %arg7[%c0_13, %c0_14] : memref<1x256xf32, #tpu.memory_space<vmem>>, vector<1x256xf32>
    %18 = vector.broadcast %17 : vector<1x256xf32> to vector<64x256xf32>
    %19 = arith.addf %16, %18 : vector<64x256xf32>
    %20 = arith.mulf %19, %19 : vector<64x256xf32>
    %21 = arith.mulf %19, %20 : vector<64x256xf32>
    %cst_15 = arith.constant 4.471500e-02 : f32
    %22 = vector.broadcast %cst_15 : f32 to vector<64x256xf32>
    %23 = arith.mulf %22, %21 : vector<64x256xf32>
    %24 = arith.addf %19, %23 : vector<64x256xf32>
    %cst_16 = arith.constant 0.797884583 : f32
    %25 = vector.broadcast %cst_16 : f32 to vector<64x256xf32>
    %26 = arith.mulf %25, %24 : vector<64x256xf32>
    %27 = math.tanh %26 : vector<64x256xf32>
    %cst_17 = arith.constant 1.000000e+00 : f32
    %28 = vector.broadcast %cst_17 : f32 to vector<64x256xf32>
    %29 = arith.addf %28, %27 : vector<64x256xf32>
    %cst_18 = arith.constant 5.000000e-01 : f32
    %30 = vector.broadcast %cst_18 : f32 to vector<64x256xf32>
    %31 = arith.mulf %30, %29 : vector<64x256xf32>
    %32 = arith.mulf %19, %31 : vector<64x256xf32>
    %33 = arith.truncf %32 : vector<64x256xf32> to vector<64x256xbf16>
    %c0_19 = arith.constant 0 : index
    %c0_20 = arith.constant 0 : index
    %34 = vector.load %arg8[%c0_19, %c0_20] : memref<256x128xbf16, #tpu.memory_space<vmem>>, vector<256x128xbf16>
    %cst_21 = arith.constant dense<0.000000e+00> : vector<64x128xf32>
    %35 = tpu.matmul %33, %34, %cst_21 {dimension_numbers = #tpu.dot_dimension_numbers<[1], [0], [0], [1], [0, 0, 1, 1], [], []>} : vector<64x256xbf16>, vector<256x128xbf16>, vector<64x128xf32> -> vector<64x128xf32>
    %36 = arith.addf %13, %35 : vector<64x128xf32>
    %c0_22 = arith.constant 0 : index
    %c0_23 = arith.constant 0 : index
    %37 = vector.load %arg9[%c0_22, %c0_23] : memref<1x128xf32, #tpu.memory_space<vmem>>, vector<1x128xf32>
    %38 = vector.broadcast %37 : vector<1x128xf32> to vector<64x128xf32>
    %39 = arith.addf %36, %38 : vector<64x128xf32>
    %c0_24 = arith.constant 0 : index
    %c0_25 = arith.constant 0 : index
    %40 = vector.load %arg10[%c0_24, %c0_25] : memref<1x128xf32, #tpu.memory_space<vmem>>, vector<1x128xf32>
    %41 = vector.broadcast %40 : vector<1x128xf32> to vector<64x128xf32>
    %42 = arith.mulf %39, %41 : vector<64x128xf32>
    %cst_26 = arith.constant dense<0.000000e+00> : vector<64xf32>
    %43 = vector.multi_reduction <add>, %42, %cst_26 [1] : vector<64x128xf32> to vector<64xf32>
    %44 = vector.shape_cast %43 : vector<64xf32> to vector<64x1xf32>
    %c0_27 = arith.constant 0 : index
    %c0_28 = arith.constant 0 : index
    %45 = vector.load %arg11[%c0_27, %c0_28] : memref<1x1xf32, #tpu.memory_space<vmem>>, vector<1x1xf32>
    %46 = vector.broadcast %45 : vector<1x1xf32> to vector<64x1xf32>
    %47 = arith.addf %44, %46 : vector<64x1xf32>
    %c0_29 = arith.constant 0 : index
    %c0_30 = arith.constant 0 : index
    %c0_31 = arith.constant 0 : index
    %c0_32 = arith.constant 0 : index
    %48 = vector.load %arg14[%c0_29, %c0_30, %c0_31, %c0_32] : memref<1x1x32x32xf32, #tpu.memory_space<vmem>>, vector<1x1x32x32xf32>
    %49 = vector.shape_cast %48 : vector<1x1x32x32xf32> to vector<32x32xf32>
    %c0_33 = arith.constant 0 : index
    %c0_34 = arith.constant 0 : index
    %50 = vector.load %arg12[%c0_33, %c0_34] : memref<32x64xf32, #tpu.memory_space<vmem>>, vector<32x64xf32>
    %c0_35 = arith.constant 0 : index
    %c0_36 = arith.constant 0 : index
    %51 = vector.load %arg13[%c0_35, %c0_36] : memref<64x32xf32, #tpu.memory_space<vmem>>, vector<64x32xf32>
    %52 = vector.broadcast %47 : vector<64x1xf32> to vector<64x32xf32>
    %53 = arith.mulf %52, %51 : vector<64x32xf32>
    %cst_37 = arith.constant dense<0.000000e+00> : vector<32x32xf32>
    %54 = tpu.matmul %50, %53, %cst_37 {dimension_numbers = #tpu.dot_dimension_numbers<[1], [0], [0], [1], [0, 0, 1, 1], [], []>} : vector<32x64xf32>, vector<64x32xf32>, vector<32x32xf32> -> vector<32x32xf32>
    %55 = arith.addf %49, %54 : vector<32x32xf32>
    %c0_38 = arith.constant 0 : index
    %c0_39 = arith.constant 0 : index
    %c0_40 = arith.constant 0 : index
    %c0_41 = arith.constant 0 : index
    %56 = vector.load %arg14[%c0_38, %c0_39, %c0_40, %c0_41] : memref<1x1x32x32xf32, #tpu.memory_space<vmem>>, vector<1x1x32x32xf32>
    %57 = vector.shape_cast %56 : vector<1x1x32x32xf32> to vector<32x32xf32>
    %58 = vector.shape_cast %55 : vector<32x32xf32> to vector<1x1x32x32xf32>
    tpu.vector_store %arg14[%c0_38, %c0_39, %c0_40, %c0_41], %58 {strides = array<i32>} : memref<1x1x32x32xf32, #tpu.memory_space<vmem>>, vector<1x1x32x32xf32>,
    return
  }
  func.func @transform_0(%arg0: i32, %arg1: i32) -> (i32, i32, i32) {
    %c0_i32 = arith.constant 0 : i32
    %c0_i32_0 = arith.constant 0 : i32
    return %arg0, %arg1, %c0_i32 : i32, i32, i32
  }
  func.func @transform_1(%arg0: i32, %arg1: i32) -> (i32, i32, i32) {
    %c0_i32 = arith.constant 0 : i32
    %c0_i32_0 = arith.constant 0 : i32
    %c0_i32_1 = arith.constant 0 : i32
    return %arg0, %c0_i32, %c0_i32_0 : i32, i32, i32
  }
  func.func @transform_2(%arg0: i32, %arg1: i32) -> (i32, i32) {
    %c0_i32 = arith.constant 0 : i32
    %c0_i32_0 = arith.constant 0 : i32
    %c0_i32_1 = arith.constant 0 : i32
    return %c0_i32, %c0_i32_0 : i32, i32
  }
  func.func @transform_3(%arg0: i32, %arg1: i32) -> (i32, i32) {
    %c0_i32 = arith.constant 0 : i32
    %c0_i32_0 = arith.constant 0 : i32
    %c0_i32_1 = arith.constant 0 : i32
    return %c0_i32, %c0_i32_0 : i32, i32
  }
  func.func @transform_4(%arg0: i32, %arg1: i32) -> (i32, i32) {
    %c0_i32 = arith.constant 0 : i32
    %c0_i32_0 = arith.constant 0 : i32
    %c0_i32_1 = arith.constant 0 : i32
    return %c0_i32, %c0_i32_0 : i32, i32
  }
  func.func @transform_5(%arg0: i32, %arg1: i32) -> (i32, i32) {
    %c0_i32 = arith.constant 0 : i32
    %c0_i32_0 = arith.constant 0 : i32
    %c0_i32_1 = arith.constant 0 : i32
    return %c0_i32, %c0_i32_0 : i32, i32
  }
  func.func @transform_6(%arg0: i32, %arg1: i32) -> (i32, i32) {
    %c0_i32 = arith.constant 0 : i32
    %c0_i32_0 = arith.constant 0 : i32
    %c0_i32_1 = arith.constant 0 : i32
    return %c0_i32, %c0_i32_0 : i32, i32
  }
  func.func @transform_7(%arg0: i32, %arg1: i32) -> (i32, i32) {
    %c0_i32 = arith.constant 0 : i32
    %c0_i32_0 = arith.constant 0 : i32
    %c0_i32_1 = arith.constant 0 : i32
    return %c0_i32, %c0_i32_0 : i32, i32
  }
  func.func @transform_8(%arg0: i32, %arg1: i32) -> (i32, i32) {
    %c0_i32 = arith.constant 0 : i32
    %c0_i32_0 = arith.constant 0 : i32
    %c0_i32_1 = arith.constant 0 : i32
    return %c0_i32, %c0_i32_0 : i32, i32
  }
  func.func @transform_9(%arg0: i32, %arg1: i32) -> (i32, i32) {
    %c0_i32 = arith.constant 0 : i32
    %c0_i32_0 = arith.constant 0 : i32
    %c0_i32_1 = arith.constant 0 : i32
    return %c0_i32, %c0_i32_0 : i32, i32
  }
  func.func @transform_10(%arg0: i32, %arg1: i32) -> (i32, i32) {
    %c0_i32 = arith.constant 0 : i32
    %c0_i32_0 = arith.constant 0 : i32
    return %c0_i32, %arg1 : i32, i32
  }
  func.func @transform_11(%arg0: i32, %arg1: i32) -> (i32, i32) {
    %c0_i32 = arith.constant 0 : i32
    %c0_i32_0 = arith.constant 0 : i32
    return %arg1, %c0_i32 : i32, i32
  }
  func.func @transform_12(%arg0: i32, %arg1: i32) -> (i32, i32, i32, i32) {
    %c0_i32 = arith.constant 0 : i32
    %c0_i32_0 = arith.constant 0 : i32
    %c0_i32_1 = arith.constant 0 : i32
    %c0_i32_2 = arith.constant 0 : i32
    return %arg0, %c0_i32, %c0_i32_0, %c0_i32_1 : i32, i32, i32, i32
  }
}

</mosaic_0001>

<llo_original>
// kernel: sam_finetuner_forward.1
$region0: #{sam_finetuner_forward.1}
  #allocation0 [shape = 'u32[]', space=smem, size = 0x4, offset = 0x4, fixed_abs, tag = 'smem constant byte address 0x4 - core index']
  #allocation1 [shape = 'u32[144,128]{1,0:T(1,128)}', space=vmem, size = 0x12000, scoped, tag = 'internal scratch']
  #allocation2 [shape = 'f32[1,1]{1,0:T(1,128)S(1)}', space=vmem, size = 0x200, scoped, tag = 'scoped memory for sam_finetuner_forward.1']
  %s0 = inlined_call_operand.vmem [shape: bf16[2,64,128], index: 0, kind: input, shape index: {}]
  %s1 = inlined_call_operand.vmem [shape: f32[2,1,128], index: 1, kind: input, shape index: {}]
  %s2 = inlined_call_operand.vmem [shape: bf16[128,128], index: 2, kind: input, shape index: {}]
  %s3 = inlined_call_operand.vmem [shape: f32[1,128], index: 3, kind: input, shape index: {}, may-alias: {3,7}]
  %s4 = inlined_call_operand.vmem [shape: bf16[128,256], index: 4, kind: input, shape index: {}]
  %s5 = inlined_call_operand.vmem [shape: f32[1,256], index: 5, kind: input, shape index: {}]
  %s6 = inlined_call_operand.vmem [shape: bf16[256,128], index: 6, kind: input, shape index: {}]
  %s7 = inlined_call_operand.vmem [shape: f32[1,128], index: 7, kind: input, shape index: {}, may-alias: {3,7}]
  %s8 = inlined_call_operand.vmem [shape: f32[1,128], index: 8, kind: input, shape index: {}]
  %s9 = inlined_call_operand.<no memory space> [shape: f32[1,1], index: 9, kind: input, shape index: {}]
  %s10 = inlined_call_operand.vmem [shape: f32[32,64], index: 10, kind: input, shape index: {}]
  %s11 = inlined_call_operand.vmem [shape: f32[64,32], index: 11, kind: input, shape index: {}]
  %s12 = inlined_call_operand.hbm [shape: f32[2,1,32,32], index: 12, kind: output, shape index: {}]
  %s13 = sld [smem:[#allocation0]]
  $region85: #{sam_finetuner_forward.1} parent=0
    _
  %s15 = ssub.s32 1, %s13
  %s16 = scalar_select 0, %s15, %s13
  %v17 = vstv %s9
  %18 = vst [vmem:[#allocation2] sm:$0x1] %v17
  $region1: #{sam_finetuner_forward.1} parent=0
    #allocation3 [shape = 'u8[32768]{0}', space=vmem, size = 0x8000, scoped, tag = 'output window, operand 0']
    #allocation4 [shape = 's32[2]{0}', space=sflag, size = 0x8, scoped, tag = 'scoped memory for sam_finetuner_forward.1']
    %19 = vsyncpa [#allocation4], 0
    %s20 = scalar_lea.sflag [#allocation4], 1
    %21 = vsyncpa %s20, 0
    loop: start=0, step=1, limit=4
    $region2: #{sam_finetuner_forward.1} parent=1 // loop_pre_header
      _
    $region3: #{sam_finetuner_forward.1} parent=1 // loop_header
      %s23 = sphi 0, %s27
      %p24 = scmp.ge.s32.totalorder %s23, 4
      %s30 = sphi 0, %s42
      %s31 = sphi 0, %s38
      %s32 = sphi 0, %s30
      %s33 = sphi 0, %s31
      %s34 = sphi 0, %s32
      %s35 = sphi 0, %s33
      %s47 = sphi 0, %s49
      %s50 = sphi 0, %s47
      %s51 = sphi 0, %s50
      %s67 = sphi 0, %s51
      %s73 = sphi 0, %s75
      %s76 = sphi 0, %s73
      %s77 = sphi 0, %s76
      %s93 = sphi 0, %s77
      %s97 = sphi 0, %s97
      %s99 = sphi 0, %s97
      %s100 = sphi 0, %s99
      %s114 = sphi 0, %s100
      %s118 = sphi 0, %s118
      %s120 = sphi 0, %s118
      %s121 = sphi 0, %s120
      %s135 = sphi 0, %s121
      %s139 = sphi 0, %s139
      %s141 = sphi 0, %s139
      %s142 = sphi 0, %s141
      %s156 = sphi 0, %s142
      %s160 = sphi 0, %s160
      %s162 = sphi 0, %s160
      %s163 = sphi 0, %s162
      %s177 = sphi 0, %s163
      %s181 = sphi 0, %s181
      %s183 = sphi 0, %s181
      %s184 = sphi 0, %s183
      %s198 = sphi 0, %s184
      %s202 = sphi 0, %s202
      %s204 = sphi 0, %s202
      %s205 = sphi 0, %s204
      %s219 = sphi 0, %s205
      %s223 = sphi 0, %s223
      %s225 = sphi 0, %s223
      %s226 = sphi 0, %s225
      %s240 = sphi 0, %s226
      %s244 = sphi 0, %s244
      %s246 = sphi 0, %s244
      %s247 = sphi 0, %s246
      %s261 = sphi 0, %s247
      %s267 = sphi 0, %s269
      %s270 = sphi 0, %s267
      %s271 = sphi 0, %s270
      %s287 = sphi 0, %s271
      %s293 = sphi 0, %s295
      %s296 = sphi 0, %s293
      %s297 = sphi 0, %s296
      %s313 = sphi 0, %s297
      %s319 = sphi 0, %s321
      %s322 = sphi 0, %s319
      %s323 = sphi 0, %s322
      %s339 = sphi 0, %s323
    $region4: #{sam_finetuner_forward.1} parent=1 // loop_header_branch
      %26 = sbr.rel (%p24) target = $region8
    $region5: #{sam_finetuner_forward.1} parent=1 // loop_body
      %s28 = ssub.s32 %s23, 1
      %s29 = ssub.s32 %s23, 2
      %s36 = sadd.s32 1, %s31
      %p37 = scmp.ge.s32.totalorder %s36, 1
      %s38 = scalar_select %p37, 0, %s36
      %s39 = sadd.s32 1, %s30
      %s40 = scalar_select %p37, %s39, %s30
      %p41 = scmp.ge.s32.totalorder %s40, 2
      %s42 = scalar_select %p41, 0, %s40
      %s43 = ssub.s32 %s30, %s42
      %s44 = ssub.s32 %s31, %s38
      %s45 = sor.u32 %s43, %s44
      %p46 = scmp.eq.s32.totalorder %s45, 0
      %s48 = sadd.s32 %s47, 1
      %s49 = scalar_select %p46, %s47, %s48
      %p52 = pneg %p46
      %p53 = scmp.eq.s32.totalorder %s23, 1
      %p54 = por %p52, %p53
      %p55 = scmp.ne.s32.totalorder %s47, %s50
      %p56 = scmp.eq.s32.totalorder %s23, 0
      %p57 = por %p55, %p56
      %p58 = scmp.ne.s32.totalorder %s47, %s50
      %p59 = scmp.eq.s32.totalorder %s28, 1
      %p60 = por %p58, %p59
      %p61 = scmp.ne.s32.totalorder %s50, %s51
      %p62 = scmp.eq.s32.totalorder %s28, 0
      %p63 = por %p61, %p62
      %p64 = scmp.ne.s32.totalorder %s50, %s51
      %p65 = scmp.eq.s32.totalorder %s29, 1
      %p66 = por %p64, %p65
      %p68 = scmp.ne.s32.totalorder %s51, %s67
      %p69 = scmp.eq.s32.totalorder %s29, 0
      %p70 = por %p68, %p69
      %s71 = ssub.s32 %s30, %s42
      %p72 = scmp.eq.s32.totalorder %s71, 0
      %s74 = sadd.s32 %s73, 1
      %s75 = scalar_select %p72, %s73, %s74
      %p78 = pneg %p72
      %p79 = scmp.eq.s32.totalorder %s23, 1
      %p80 = por %p78, %p79
      %p81 = scmp.ne.s32.totalorder %s73, %s76
      %p82 = scmp.eq.s32.totalorder %s23, 0
      %p83 = por %p81, %p82
      %p84 = scmp.ne.s32.totalorder %s73, %s76
      %p85 = scmp.eq.s32.totalorder %s28, 1
      %p86 = por %p84, %p85
      %p87 = scmp.ne.s32.totalorder %s76, %s77
      %p88 = scmp.eq.s32.totalorder %s28, 0
      %p89 = por %p87, %p88
      %p90 = scmp.ne.s32.totalorder %s76, %s77
      %p91 = scmp.eq.s32.totalorder %s29, 1
      %p92 = por %p90, %p91
      %p94 = scmp.ne.s32.totalorder %s77, %s93
      %p95 = scmp.eq.s32.totalorder %s29, 0
      %p96 = por %p94, %p95
      %s98 = sadd.s32 %s97, 1
      %p101 = scmp.eq.s32.totalorder %s23, 1
      %p102 = scmp.ne.s32.totalorder %s97, %s99
      %p103 = scmp.eq.s32.totalorder %s23, 0
      %p104 = por %p102, %p103
      %p105 = scmp.ne.s32.totalorder %s97, %s99
      %p106 = scmp.eq.s32.totalorder %s28, 1
      %p107 = por %p105, %p106
      %p108 = scmp.ne.s32.totalorder %s99, %s100
      %p109 = scmp.eq.s32.totalorder %s28, 0
      %p110 = por %p108, %p109
      %p111 = scmp.ne.s32.totalorder %s99, %s100
      %p112 = scmp.eq.s32.totalorder %s29, 1
      %p113 = por %p111, %p112
      %p115 = scmp.ne.s32.totalorder %s100, %s114
      %p116 = scmp.eq.s32.totalorder %s29, 0
      %p117 = por %p115, %p116
      %s119 = sadd.s32 %s118, 1
      %p122 = scmp.eq.s32.totalorder %s23, 1
      %p123 = scmp.ne.s32.totalorder %s118, %s120
      %p124 = scmp.eq.s32.totalorder %s23, 0
      %p125 = por %p123, %p124
      %p126 = scmp.ne.s32.totalorder %s118, %s120
      %p127 = scmp.eq.s32.totalorder %s28, 1
      %p128 = por %p126, %p127
      %p129 = scmp.ne.s32.totalorder %s120, %s121
      %p130 = scmp.eq.s32.totalorder %s28, 0
      %p131 = por %p129, %p130
      %p132 = scmp.ne.s32.totalorder %s120, %s121
      %p133 = scmp.eq.s32.totalorder %s29, 1
      %p134 = por %p132, %p133
      %p136 = scmp.ne.s32.totalorder %s121, %s135
      %p137 = scmp.eq.s32.totalorder %s29, 0
      %p138 = por %p136, %p137
      %s140 = sadd.s32 %s139, 1
      %p143 = scmp.eq.s32.totalorder %s23, 1
      %p144 = scmp.ne.s32.totalorder %s139, %s141
      %p145 = scmp.eq.s32.totalorder %s23, 0
      %p146 = por %p144, %p145
      %p147 = scmp.ne.s32.totalorder %s139, %s141
      %p148 = scmp.eq.s32.totalorder %s28, 1
      %p149 = por %p147, %p148
      %p150 = scmp.ne.s32.totalorder %s141, %s142
      %p151 = scmp.eq.s32.totalorder %s28, 0
      %p152 = por %p150, %p151
      %p153 = scmp.ne.s32.totalorder %s141, %s142
      %p154 = scmp.eq.s32.totalorder %s29, 1
      %p155 = por %p153, %p154
      %p157 = scmp.ne.s32.totalorder %s142, %s156
      %p158 = scmp.eq.s32.totalorder %s29, 0
      %p159 = por %p157, %p158
      %s161 = sadd.s32 %s160, 1
      %p164 = scmp.eq.s32.totalorder %s23, 1
      %p165 = scmp.ne.s32.totalorder %s160, %s162
      %p166 = scmp.eq.s32.totalorder %s23, 0
      %p167 = por %p165, %p166
      %p168 = scmp.ne.s32.totalorder %s160, %s162
      %p169 = scmp.eq.s32.totalorder %s28, 1
      %p170 = por %p168, %p169
      %p171 = scmp.ne.s32.totalorder %s162, %s163
      %p172 = scmp.eq.s32.totalorder %s28, 0
      %p173 = por %p171, %p172
      %p174 = scmp.ne.s32.totalorder %s162, %s163
      %p175 = scmp.eq.s32.totalorder %s29, 1
      %p176 = por %p174, %p175
      %p178 = scmp.ne.s32.totalorder %s163, %s177
      %p179 = scmp.eq.s32.totalorder %s29, 0
      %p180 = por %p178, %p179
      %s182 = sadd.s32 %s181, 1
      %p185 = scmp.eq.s32.totalorder %s23, 1
      %p186 = scmp.ne.s32.totalorder %s181, %s183
      %p187 = scmp.eq.s32.totalorder %s23, 0
      %p188 = por %p186, %p187
      %p189 = scmp.ne.s32.totalorder %s181, %s183
      %p190 = scmp.eq.s32.totalorder %s28, 1
      %p191 = por %p189, %p190
      %p192 = scmp.ne.s32.totalorder %s183, %s184
      %p193 = scmp.eq.s32.totalorder %s28, 0
      %p194 = por %p192, %p193
      %p195 = scmp.ne.s32.totalorder %s183, %s184
      %p196 = scmp.eq.s32.totalorder %s29, 1
      %p197 = por %p195, %p196
      %p199 = scmp.ne.s32.totalorder %s184, %s198
      %p200 = scmp.eq.s32.totalorder %s29, 0
      %p201 = por %p199, %p200
      %s203 = sadd.s32 %s202, 1
      %p206 = scmp.eq.s32.totalorder %s23, 1
      %p207 = scmp.ne.s32.totalorder %s202, %s204
      %p208 = scmp.eq.s32.totalorder %s23, 0
      %p209 = por %p207, %p208
      %p210 = scmp.ne.s32.totalorder %s202, %s204
      %p211 = scmp.eq.s32.totalorder %s28, 1
      %p212 = por %p210, %p211
      %p213 = scmp.ne.s32.totalorder %s204, %s205
      %p214 = scmp.eq.s32.totalorder %s28, 0
      %p215 = por %p213, %p214
      %p216 = scmp.ne.s32.totalorder %s204, %s205
      %p217 = scmp.eq.s32.totalorder %s29, 1
      %p218 = por %p216, %p217
      %p220 = scmp.ne.s32.totalorder %s205, %s219
      %p221 = scmp.eq.s32.totalorder %s29, 0
      %p222 = por %p220, %p221
      %s224 = sadd.s32 %s223, 1
      %p227 = scmp.eq.s32.totalorder %s23, 1
      %p228 = scmp.ne.s32.totalorder %s223, %s225
      %p229 = scmp.eq.s32.totalorder %s23, 0
      %p230 = por %p228, %p229
      %p231 = scmp.ne.s32.totalorder %s223, %s225
      %p232 = scmp.eq.s32.totalorder %s28, 1
      %p233 = por %p231, %p232
      %p234 = scmp.ne.s32.totalorder %s225, %s226
      %p235 = scmp.eq.s32.totalorder %s28, 0
      %p236 = por %p234, %p235
      %p237 = scmp.ne.s32.totalorder %s225, %s226
      %p238 = scmp.eq.s32.totalorder %s29, 1
      %p239 = por %p237, %p238
      %p241 = scmp.ne.s32.totalorder %s226, %s240
      %p242 = scmp.eq.s32.totalorder %s29, 0
      %p243 = por %p241, %p242
      %s245 = sadd.s32 %s244, 1
      %p248 = scmp.eq.s32.totalorder %s23, 1
      %p249 = scmp.ne.s32.totalorder %s244, %s246
      %p250 = scmp.eq.s32.totalorder %s23, 0
      %p251 = por %p249, %p250
      %p252 = scmp.ne.s32.totalorder %s244, %s246
      %p253 = scmp.eq.s32.totalorder %s28, 1
      %p254 = por %p252, %p253
      %p255 = scmp.ne.s32.totalorder %s246, %s247
      %p256 = scmp.eq.s32.totalorder %s28, 0
      %p257 = por %p255, %p256
      %p258 = scmp.ne.s32.totalorder %s246, %s247
      %p259 = scmp.eq.s32.totalorder %s29, 1
      %p260 = por %p258, %p259
      %p262 = scmp.ne.s32.totalorder %s247, %s261
      %p263 = scmp.eq.s32.totalorder %s29, 0
      %p264 = por %p262, %p263
      %s265 = ssub.s32 %s31, %s38
      %p266 = scmp.eq.s32.totalorder %s265, 0
      %s268 = sadd.s32 %s267, 1
      %s269 = scalar_select %p266, %s267, %s268
      %p272 = pneg %p266
      %p273 = scmp.eq.s32.totalorder %s23, 1
      %p274 = por %p272, %p273
      %p275 = scmp.ne.s32.totalorder %s267, %s270
      %p276 = scmp.eq.s32.totalorder %s23, 0
      %p277 = por %p275, %p276
      %p278 = scmp.ne.s32.totalorder %s267, %s270
      %p279 = scmp.eq.s32.totalorder %s28, 1
      %p280 = por %p278, %p279
      %p281 = scmp.ne.s32.totalorder %s270, %s271
      %p282 = scmp.eq.s32.totalorder %s28, 0
      %p283 = por %p281, %p282
      %p284 = scmp.ne.s32.totalorder %s270, %s271
      %p285 = scmp.eq.s32.totalorder %s29, 1
      %p286 = por %p284, %p285
      %p288 = scmp.ne.s32.totalorder %s271, %s287
      %p289 = scmp.eq.s32.totalorder %s29, 0
      %p290 = por %p288, %p289
      %s291 = ssub.s32 %s31, %s38
      %p292 = scmp.eq.s32.totalorder %s291, 0
      %s294 = sadd.s32 %s293, 1
      %s295 = scalar_select %p292, %s293, %s294
      %p298 = pneg %p292
      %p299 = scmp.eq.s32.totalorder %s23, 1
      %p300 = por %p298, %p299
      %p301 = scmp.ne.s32.totalorder %s293, %s296
      %p302 = scmp.eq.s32.totalorder %s23, 0
      %p303 = por %p301, %p302
      %p304 = scmp.ne.s32.totalorder %s293, %s296
      %p305 = scmp.eq.s32.totalorder %s28, 1
      %p306 = por %p304, %p305
      %p307 = scmp.ne.s32.totalorder %s296, %s297
      %p308 = scmp.eq.s32.totalorder %s28, 0
      %p309 = por %p307, %p308
      %p310 = scmp.ne.s32.totalorder %s296, %s297
      %p311 = scmp.eq.s32.totalorder %s29, 1
      %p312 = por %p310, %p311
      %p314 = scmp.ne.s32.totalorder %s297, %s313
      %p315 = scmp.eq.s32.totalorder %s29, 0
      %p316 = por %p314, %p315
      %s317 = ssub.s32 %s30, %s42
      %p318 = scmp.eq.s32.totalorder %s317, 0
      %s320 = sadd.s32 %s319, 1
      %s321 = scalar_select %p318, %s319, %s320
      %p324 = pneg %p318
      %p325 = scmp.eq.s32.totalorder %s23, 1
      %p326 = por %p324, %p325
      %p327 = scmp.ne.s32.totalorder %s319, %s322
      %p328 = scmp.eq.s32.totalorder %s23, 0
      %p329 = por %p327, %p328
      %p330 = scmp.ne.s32.totalorder %s319, %s322
      %p331 = scmp.eq.s32.totalorder %s28, 1
      %p332 = por %p330, %p331
      %p333 = scmp.ne.s32.totalorder %s322, %s323
      %p334 = scmp.eq.s32.totalorder %s28, 0
      %p335 = por %p333, %p334
      %p336 = scmp.ne.s32.totalorder %s322, %s323
      %p337 = scmp.eq.s32.totalorder %s29, 1
      %p338 = por %p336, %p337
      %p340 = scmp.ne.s32.totalorder %s323, %s339
      %p341 = scmp.eq.s32.totalorder %s29, 0
      %p342 = por %p340, %p341
      %p343 = scmp.le.s32.totalorder 1, %s23
      %p344 = scmp.lt.s32.totalorder %s23, 3
      %p345 = pnand %p343, %p344
      %p346 = pneg %p345
      // Predicated region
      $region9: #{sam_finetuner_forward.1} parent=5 // pred_check
        _
      $region10: #{sam_finetuner_forward.1} parent=5 // pred_check_branch
        %348 = sbr.rel (%p345) target = $region12
      $region11: #{sam_finetuner_forward.1} parent=5 // pred_region
        %s349 = ssub.s32 %s23, 1
        // Predicated region
        $region13: #{sam_finetuner_forward.1} parent=11 // pred_check
          %p350 = pneg %p110
        $region14: #{sam_finetuner_forward.1} parent=11 // pred_check_branch
          %352 = sbr.rel (%p350) target = $region16
        $region15: #{sam_finetuner_forward.1} parent=11 // pred_region
          _
        $region16: #{sam_finetuner_forward.1} parent=11 // pred_fallthru
          _
        // Predicated region
        $region17: #{sam_finetuner_forward.1} parent=11 // pred_check
          %p353 = pneg %p131
        $region18: #{sam_finetuner_forward.1} parent=11 // pred_check_branch
          %355 = sbr.rel (%p353) target = $region20
        $region19: #{sam_finetuner_forward.1} parent=11 // pred_region
          _
        $region20: #{sam_finetuner_forward.1} parent=11 // pred_fallthru
          _
        // Predicated region
        $region21: #{sam_finetuner_forward.1} parent=11 // pred_check
          %p356 = pneg %p152
        $region22: #{sam_finetuner_forward.1} parent=11 // pred_check_branch
          %358 = sbr.rel (%p356) target = $region24
        $region23: #{sam_finetuner_forward.1} parent=11 // pred_region
          _
        $region24: #{sam_finetuner_forward.1} parent=11 // pred_fallthru
          _
        // Predicated region
        $region25: #{sam_finetuner_forward.1} parent=11 // pred_check
          %p359 = pneg %p173
        $region26: #{sam_finetuner_forward.1} parent=11 // pred_check_branch
          %361 = sbr.rel (%p359) target = $region28
        $region27: #{sam_finetuner_forward.1} parent=11 // pred_region
          _
        $region28: #{sam_finetuner_forward.1} parent=11 // pred_fallthru
          _
        // Predicated region
        $region29: #{sam_finetuner_forward.1} parent=11 // pred_check
          %p362 = pneg %p194
        $region30: #{sam_finetuner_forward.1} parent=11 // pred_check_branch
          %364 = sbr.rel (%p362) target = $region32
        $region31: #{sam_finetuner_forward.1} parent=11 // pred_region
          _
        $region32: #{sam_finetuner_forward.1} parent=11 // pred_fallthru
          _
        // Predicated region
        $region33: #{sam_finetuner_forward.1} parent=11 // pred_check
          %p365 = pneg %p215
        $region34: #{sam_finetuner_forward.1} parent=11 // pred_check_branch
          %367 = sbr.rel (%p365) target = $region36
        $region35: #{sam_finetuner_forward.1} parent=11 // pred_region
          _
        $region36: #{sam_finetuner_forward.1} parent=11 // pred_fallthru
          _
        // Predicated region
        $region37: #{sam_finetuner_forward.1} parent=11 // pred_check
          %p368 = pneg %p236
        $region38: #{sam_finetuner_forward.1} parent=11 // pred_check_branch
          %370 = sbr.rel (%p368) target = $region40
        $region39: #{sam_finetuner_forward.1} parent=11 // pred_region
          _
        $region40: #{sam_finetuner_forward.1} parent=11 // pred_fallthru
          _
        // Predicated region
        $region41: #{sam_finetuner_forward.1} parent=11 // pred_check
          %p371 = pneg %p257
        $region42: #{sam_finetuner_forward.1} parent=11 // pred_check_branch
          %373 = sbr.rel (%p371) target = $region44
        $region43: #{sam_finetuner_forward.1} parent=11 // pred_region
          _
        $region44: #{sam_finetuner_forward.1} parent=11 // pred_fallthru
          _
        // Predicated region
        $region45: #{sam_finetuner_forward.1} parent=11 // pred_check
          %p374 = pneg %p283
        $region46: #{sam_finetuner_forward.1} parent=11 // pred_check_branch
          %376 = sbr.rel (%p374) target = $region48
        $region47: #{sam_finetuner_forward.1} parent=11 // pred_region
          %p377 = scmp.lt.s32.totalorder %s33, 0
          %s378 = scalar_select %p377, %s33, 0
          %s379 = smul.addr %s378, 8
          %s380 = scalar_lea.vmem %s10, %s379
        $region48: #{sam_finetuner_forward.1} parent=11 // pred_fallthru
          _
        // Predicated region
        $region49: #{sam_finetuner_forward.1} parent=11 // pred_check
          %p381 = pneg %p309
        $region50: #{sam_finetuner_forward.1} parent=11 // pred_check_branch
          %383 = sbr.rel (%p381) target = $region52
        $region51: #{sam_finetuner_forward.1} parent=11 // pred_region
          %s384 = smul.u32 8, %s33
          %p385 = scmp.lt.s32.totalorder %s384, 7
          %s386 = scalar_select %p385, %s384, 7
          %s387 = smul.addr %s386, 8
          %s388 = scalar_lea.vmem %s11, %s387
          %s389 = smul.u32 8, %s33
        $region52: #{sam_finetuner_forward.1} parent=11 // pred_fallthru
          _
      $region12: #{sam_finetuner_forward.1} parent=5 // pred_fallthru
        _
      %p390 = scmp.lt.s32.totalorder %s23, 2
      // Predicated region
      $region53: #{sam_finetuner_forward.1} parent=5 // pred_check
        %p391 = pneg %p390
      $region54: #{sam_finetuner_forward.1} parent=5 // pred_check_branch
        %393 = sbr.rel (%p391) target = $region56
      $region55: #{sam_finetuner_forward.1} parent=5 // pred_region
        // Predicated region
        $region57: #{sam_finetuner_forward.1} parent=55 // pred_check
          %p394 = pneg %p57
        $region58: #{sam_finetuner_forward.1} parent=55 // pred_check_branch
          %396 = sbr.rel (%p394) target = $region60
        $region59: #{sam_finetuner_forward.1} parent=55 // pred_region
          %s397 = smul.u32 8, %s31
          %p398 = scmp.lt.s32.totalorder %s30, 1
          %s399 = scalar_select %p398, %s30, 1
          %p400 = scmp.lt.s32.totalorder %s397, 7
          %s401 = scalar_select %p400, %s397, 7
          %s402 = smul.addr %s399, 8
          %s403 = sadd.s32 %s401, %s402
          %s404 = smul.addr %s403, 4
          %s405 = scalar_lea.vmem %s0, %s404
          %s406 = smul.u32 8, %s31
        $region60: #{sam_finetuner_forward.1} parent=55 // pred_fallthru
          _
        // Predicated region
        $region61: #{sam_finetuner_forward.1} parent=55 // pred_check
          %p407 = pneg %p83
        $region62: #{sam_finetuner_forward.1} parent=55 // pred_check_branch
          %409 = sbr.rel (%p407) target = $region64
        $region63: #{sam_finetuner_forward.1} parent=55 // pred_region
          %p410 = scmp.lt.s32.totalorder %s30, 1
          %s411 = scalar_select %p410, %s30, 1
          %s412 = scalar_lea.vmem %s1, %s411
        $region64: #{sam_finetuner_forward.1} parent=55 // pred_fallthru
          _
      $region56: #{sam_finetuner_forward.1} parent=5 // pred_fallthru
        _
      %p413 = scmp.le.s32.totalorder 1, %s23
      %p414 = scmp.lt.s32.totalorder %s23, 3
      %p415 = pnand %p413, %p414
      %p416 = pneg %p415
      // Predicated region
      $region65: #{sam_finetuner_forward.1} parent=5 // pred_check
        _
      $region66: #{sam_finetuner_forward.1} parent=5 // pred_check_branch
        %418 = sbr.rel (%p415) target = $region68
      $region67: #{sam_finetuner_forward.1} parent=5 // pred_region
        %s419 = ssub.s32 %s23, 1
        %s420 = smul.u32 8, %s33
        %p421 = scmp.lt.s32.totalorder %s32, 1
        %s422 = scalar_select %p421, %s32, 1
        %p423 = scmp.lt.s32.totalorder %s420, 7
        %s424 = scalar_select %p423, %s420, 7
        %s425 = smul.addr %s422, 8
        %s426 = sadd.s32 %s424, %s425
        %s427 = smul.addr %s426, 4
        %s428 = scalar_lea.vmem %s0, %s427
        %p429 = pneg %p63
        %p430 = pneg %p60
        %p431 = scmp.lt.s32.totalorder %s32, 1
        %s432 = scalar_select %p431, %s32, 1
        %s433 = scalar_lea.vmem %s1, %s432
        %p434 = pneg %p89
        %p435 = pneg %p86
        %p436 = pneg %p110
        %p437 = pneg %p107
        %p438 = pneg %p131
        %p439 = pneg %p128
        %p440 = pneg %p152
        %p441 = pneg %p149
        %p442 = pneg %p173
        %p443 = pneg %p170
        %p444 = pneg %p194
        %p445 = pneg %p191
        %p446 = pneg %p215
        %p447 = pneg %p212
        %p448 = pneg %p236
        %p449 = pneg %p233
        %p450 = pneg %p257
        %p451 = pneg %p254
        %p452 = scmp.lt.s32.totalorder %s33, 0
        %s453 = scalar_select %p452, %s33, 0
        %s454 = smul.addr %s453, 8
        %s455 = scalar_lea.vmem %s10, %s454
        %p456 = pneg %p283
        %p457 = pneg %p280
        %s458 = smul.u32 8, %s33
        %p459 = scmp.lt.s32.totalorder %s458, 7
        %s460 = scalar_select %p459, %s458, 7
        %s461 = smul.addr %s460, 8
        %s462 = scalar_lea.vmem %s11, %s461
        %p463 = pneg %p309
        %p464 = pneg %p306
        %p465 = pneg %p335
        %p466 = pneg %p332
        %s467 = sand.u32 %s322, 1
        %s468 = scalar_lea.sflag [#allocation4], %s467
        %s469 = sand.u32 %s322, 1
        %s470 = smul.addr %s469, 32
        %s471 = scalar_lea.vmem [#allocation3], %s470
        %s472 = smul.u32 8, %s33
        %p473 = scmp.lt.s32.totalorder %s32, 1
        %s474 = scalar_select %p473, %s32, 1
        %p475 = scmp.lt.s32.totalorder %s472, 7
        %s476 = scalar_select %p475, %s472, 7
        %s477 = smul.addr %s474, 8
        %s478 = sadd.s32 %s476, %s477
        %s479 = smul.addr %s478, 4
        %s480 = scalar_lea.vmem %s0, %s479
        %s481 = smul.u32 8, %s33
        %p482 = scmp.lt.s32.totalorder %s32, 1
        %s483 = scalar_select %p482, %s32, 1
        %s484 = scalar_lea.vmem %s1, %s483
        %p485 = scmp.lt.s32.totalorder %s33, 0
        %s486 = scalar_select %p485, %s33, 0
        %s487 = smul.addr %s486, 8
        %s488 = scalar_lea.vmem %s10, %s487
        %s489 = smul.u32 8, %s33
        %p490 = scmp.lt.s32.totalorder %s489, 7
        %s491 = scalar_select %p490, %s489, 7
        %s492 = smul.addr %s491, 8
        %s493 = scalar_lea.vmem %s11, %s492
        %s494 = smul.u32 8, %s33
        %p496 = scmp.eq.s32.totalorder %s33, 0
        // Predicated region
        $region69: #{sam_finetuner_forward.1} parent=67 // pred_check
          %p497 = pneg %p496
        $region70: #{sam_finetuner_forward.1} parent=67 // pred_check_branch
          %499 = sbr.rel (%p497) target = $region72
        $region71: #{sam_finetuner_forward.1} parent=67 // pred_region
          %vm500 = vcmask 261120
          %501 = vst.msk [vmem:[%s471] sm:$0xff] %vm500, 0.0
          %502 = vst.msk [vmem:[%s471 + $0x8] sm:$0xff] %vm500, 0.0
          %503 = vst.msk [vmem:[%s471 + $0x10] sm:$0xff] %vm500, 0.0
          %504 = vst.msk [vmem:[%s471 + $0x18] sm:$0xff] %vm500, 0.0
        $region72: #{sam_finetuner_forward.1} parent=67 // pred_fallthru
          _
        %v505 = vld [vmem:[%s480] sm:$0xf]
        %v506 = vld [vmem:[%s480 + $0x4] sm:$0xf]
        %v507 = vld [vmem:[%s480 + $0x8] sm:$0xf]
        %v508 = vld [vmem:[%s480 + $0xc] sm:$0xf]
        %v509 = vld [vmem:[%s480 + $0x10] sm:$0xf]
        %v510 = vld [vmem:[%s480 + $0x14] sm:$0xf]
        %v511 = vld [vmem:[%s480 + $0x18] sm:$0xf]
        %v512 = vld [vmem:[%s480 + $0x1c] sm:$0xf]
        %v513 = vld [vmem:[%s2] sm:$0xf]
        %v514 = vld [vmem:[%s2 + $0x4] sm:$0xf]
        %v515 = vld [vmem:[%s2 + $0x8] sm:$0xf]
        %v516 = vld [vmem:[%s2 + $0xc] sm:$0xf]
        %v517 = vld [vmem:[%s2 + $0x10] sm:$0xf]
        %v518 = vld [vmem:[%s2 + $0x14] sm:$0xf]
        %v519 = vld [vmem:[%s2 + $0x18] sm:$0xf]
        %v520 = vld [vmem:[%s2 + $0x1c] sm:$0xf]
        %v521 = vld [vmem:[%s2 + $0x20] sm:$0xf]
        %v522 = vld [vmem:[%s2 + $0x24] sm:$0xf]
        %v523 = vld [vmem:[%s2 + $0x28] sm:$0xf]
        %v524 = vld [vmem:[%s2 + $0x2c] sm:$0xf]
        %v525 = vld [vmem:[%s2 + $0x30] sm:$0xf]
        %v526 = vld [vmem:[%s2 + $0x34] sm:$0xf]
        %v527 = vld [vmem:[%s2 + $0x38] sm:$0xf]
        %v528 = vld [vmem:[%s2 + $0x3c] sm:$0xf]
        %v529 = vld [vmem:[%s3] sm:$0x1]
        %v531 = vlaneseq
        %v532 = vshrl.u32 %v531, 7
        %v533 = vsub.s32 0, %v532
        %v534 = vrot.slane %v529, %v533
        %v544 = vunpack.c.l.b16 %v505
        %v545 = vunpack.c.l.b16 %v506
        %v546 = vunpack.c.l.b16 %v507
        %v547 = vunpack.c.l.b16 %v508
        %v548 = vunpack.c.l.b16 %v509
        %v549 = vunpack.c.l.b16 %v510
        %v550 = vunpack.c.l.b16 %v511
        %v551 = vunpack.c.l.b16 %v512
        %v552 = vpack.c.b16 %v545, %v544
        %v553 = vpack.c.b16 %v547, %v546
        %v554 = vpack.c.b16 %v549, %v548
        %v555 = vpack.c.b16 %v551, %v550
        %v576 = vunpack.c.l.b16 %v513
        %v577 = vunpack.c.l.b16 %v514
        %v578 = vunpack.c.l.b16 %v515
        %v579 = vunpack.c.l.b16 %v516
        %v580 = vunpack.c.l.b16 %v517
        %v581 = vunpack.c.l.b16 %v518
        %v582 = vunpack.c.l.b16 %v519
        %v583 = vunpack.c.l.b16 %v520
        %v584 = vunpack.c.l.b16 %v521
        %v585 = vunpack.c.l.b16 %v522
        %v586 = vunpack.c.l.b16 %v523
        %v587 = vunpack.c.l.b16 %v524
        %v588 = vunpack.c.l.b16 %v525
        %v589 = vunpack.c.l.b16 %v526
        %v590 = vunpack.c.l.b16 %v527
        %v591 = vunpack.c.l.b16 %v528
        %v592 = vpack.c.b16 %v577, %v576
        %v593 = vpack.c.b16 %v579, %v578
        %v594 = vpack.c.b16 %v581, %v580
        %v595 = vpack.c.b16 %v583, %v582
        %v596 = vpack.c.b16 %v585, %v584
        %v597 = vpack.c.b16 %v587, %v586
        %v598 = vpack.c.b16 %v589, %v588
        %v599 = vpack.c.b16 %v591, %v590
        %608 = vmatprep.subr.bf16.mxu0 0
        %609 = vmatpush1.bf16.msra.mxu0 %v592
        %610 = vmatprep.subr.bf16.mxu0 0
        %611 = vmatpush1.bf16.msra.mxu0 %v593
        %612 = vmatprep.subr.bf16.mxu0 0
        %613 = vmatpush1.bf16.msra.mxu0 %v594
        %614 = vmatprep.subr.bf16.mxu0 0
        %615 = vmatpush1.bf16.msra.mxu0 %v595
        %616 = vmatprep.subr.bf16.mxu0 0
        %617 = vmatpush1.bf16.msra.mxu0 %v596
        %618 = vmatprep.subr.bf16.mxu0 0
        %619 = vmatpush1.bf16.msra.mxu0 %v597
        %620 = vmatprep.subr.bf16.mxu0 0
        %621 = vmatpush1.bf16.msra.mxu0 %v598
        %622 = vmatprep.subr.bf16.mxu0 0
        %623 = vmatpush1.bf16.msra.mxu0 %v599
        %624 = vmatprep.subr.bf16.mxu0 0
        %625 = vmatpush1.bf16.msra.mxu0 0
        %626 = vmatprep.subr.bf16.mxu0 0
        %627 = vmatpush1.bf16.msra.mxu0 0
        %628 = vmatprep.subr.bf16.mxu0 0
        %629 = vmatpush1.bf16.msra.mxu0 0
        %630 = vmatprep.subr.bf16.mxu0 0
        %631 = vmatpush1.bf16.msra.mxu0 0
        %632 = vmatprep.subr.bf16.mxu0 0
        %633 = vmatpush1.bf16.msra.mxu0 0
        %634 = vmatprep.subr.bf16.mxu0 0
        %635 = vmatpush1.bf16.msra.mxu0 0
        %636 = vmatprep.subr.bf16.mxu0 0
        %637 = vmatpush1.bf16.msra.mxu0 0
        %638 = vmatprep.subr.bf16.mxu0 0
        %639 = vmatpush1.bf16.msra.mxu0 0
        %640 = vmatprep.mubr.bf16.mxu0 0
        %641 = vmatmul.mubr.bf16.gmra.mrb[0].mxu0 %v552
        %v642 = vpop.f32.mrb[0].mxu0
        %v643 = vadd.f32 %v534, %v642
        %v644 = vpop.f32.mrb[0].mxu0
        %v645 = vpop.f32.mrb[0].mxu0
        %v646 = vadd.f32 %v534, %v645
        %v647 = vpop.f32.mrb[0].mxu0
        %648 = vmatprep.mubr.bf16.mxu0 0
        %649 = vmatmul.mubr.bf16.gmra.mrb[0].mxu0 %v553
        %v650 = vpop.f32.mrb[0].mxu0
        %v651 = vadd.f32 %v534, %v650
        %v652 = vpop.f32.mrb[0].mxu0
        %v653 = vpop.f32.mrb[0].mxu0
        %v654 = vadd.f32 %v534, %v653
        %v655 = vpop.f32.mrb[0].mxu0
        %656 = vmatprep.mubr.bf16.mxu0 0
        %657 = vmatmul.mubr.bf16.gmra.mrb[0].mxu0 %v554
        %v658 = vpop.f32.mrb[0].mxu0
        %v659 = vadd.f32 %v534, %v658
        %v660 = vpop.f32.mrb[0].mxu0
        %v661 = vpop.f32.mrb[0].mxu0
        %v662 = vadd.f32 %v534, %v661
        %v663 = vpop.f32.mrb[0].mxu0
        %664 = vmatprep.mubr.bf16.mxu0 0
        %665 = vmatmul.mubr.bf16.gmra.mrb[0].mxu0 %v555
        %v666 = vpop.f32.mrb[0].mxu0
        %v667 = vadd.f32 %v534, %v666
        %v668 = vpop.f32.mrb[0].mxu0
        %v669 = vpop.f32.mrb[0].mxu0
        %v670 = vadd.f32 %v534, %v669
        %v671 = vpop.f32.mrb[0].mxu0
        %672 = vdwg.mxu0
        %v673 = vld [vmem:[%s484] sm:$0x1]
        %v675 = vlaneseq
        %v676 = vshrl.u32 %v675, 7
        %v677 = vsub.s32 0, %v676
        %v678 = vrot.slane %v673, %v677
        %v680 = vadd.f32 %v643, %v678
        %v681 = vadd.f32 %v646, %v678
        %v682 = vadd.f32 %v651, %v678
        %v683 = vadd.f32 %v654, %v678
        %v684 = vadd.f32 %v659, %v678
        %v685 = vadd.f32 %v662, %v678
        %v686 = vadd.f32 %v667, %v678
        %v687 = vadd.f32 %v670, %v678
        %v688 = vpack.c.bf16 %v681, %v680
        %v689 = vpack.c.bf16 %v683, %v682
        %v690 = vpack.c.bf16 %v685, %v684
        %v691 = vpack.c.bf16 %v687, %v686
        %v692 = vld [vmem:[%s4] sm:$0xff]
        %v693 = vld [vmem:[%s4 + $0x8] sm:$0xff]
        %v694 = vld [vmem:[%s4 + $0x10] sm:$0xff]
        %v695 = vld [vmem:[%s4 + $0x18] sm:$0xff]
        %v696 = vld [vmem:[%s4 + $0x20] sm:$0xff]
        %v697 = vld [vmem:[%s4 + $0x28] sm:$0xff]
        %v698 = vld [vmem:[%s4 + $0x30] sm:$0xff]
        %v699 = vld [vmem:[%s4 + $0x38] sm:$0xff]
        %v700 = vld [vmem:[%s4 + $0x40] sm:$0xff]
        %v701 = vld [vmem:[%s4 + $0x48] sm:$0xff]
        %v702 = vld [vmem:[%s4 + $0x50] sm:$0xff]
        %v703 = vld [vmem:[%s4 + $0x58] sm:$0xff]
        %v704 = vld [vmem:[%s4 + $0x60] sm:$0xff]
        %v705 = vld [vmem:[%s4 + $0x68] sm:$0xff]
        %v706 = vld [vmem:[%s4 + $0x70] sm:$0xff]
        %v707 = vld [vmem:[%s4 + $0x78] sm:$0xff]
        %v708 = vld [vmem:[%s5] sm:$0x3]
        %v710 = vlaneseq
        %v711 = vshrl.u32 %v710, 7
        %v712 = vsub.s32 0, %v711
        %v713 = vrot.slane %v708, %v712
        %v714 = vlaneseq
        %v715 = vshrl.u32 %v714, 7
        %v716 = vsub.s32 1, %v715
        %v717 = vrot.slane %v708, %v716
        %v736 = vunpack.c.l.b16 %v692
        %v737 = vunpack.c.h.b16 %v692
        %v738 = vunpack.c.l.b16 %v693
        %v739 = vunpack.c.h.b16 %v693
        %v740 = vunpack.c.l.b16 %v694
        %v741 = vunpack.c.h.b16 %v694
        %v742 = vunpack.c.l.b16 %v695
        %v743 = vunpack.c.h.b16 %v695
        %v744 = vunpack.c.l.b16 %v696
        %v745 = vunpack.c.h.b16 %v696
        %v746 = vunpack.c.l.b16 %v697
        %v747 = vunpack.c.h.b16 %v697
        %v748 = vunpack.c.l.b16 %v698
        %v749 = vunpack.c.h.b16 %v698
        %v750 = vunpack.c.l.b16 %v699
        %v751 = vunpack.c.h.b16 %v699
        %v752 = vunpack.c.l.b16 %v700
        %v753 = vunpack.c.h.b16 %v700
        %v754 = vunpack.c.l.b16 %v701
        %v755 = vunpack.c.h.b16 %v701
        %v756 = vunpack.c.l.b16 %v702
        %v757 = vunpack.c.h.b16 %v702
        %v758 = vunpack.c.l.b16 %v703
        %v759 = vunpack.c.h.b16 %v703
        %v760 = vunpack.c.l.b16 %v704
        %v761 = vunpack.c.h.b16 %v704
        %v762 = vunpack.c.l.b16 %v705
        %v763 = vunpack.c.h.b16 %v705
        %v764 = vunpack.c.l.b16 %v706
        %v765 = vunpack.c.h.b16 %v706
        %v766 = vunpack.c.l.b16 %v707
        %v767 = vunpack.c.h.b16 %v707
        %v768 = vpack.c.b16 %v738, %v736
        %v769 = vpack.c.b16 %v739, %v737
        %v770 = vpack.c.b16 %v742, %v740
        %v771 = vpack.c.b16 %v743, %v741
        %v772 = vpack.c.b16 %v746, %v744
        %v773 = vpack.c.b16 %v747, %v745
        %v774 = vpack.c.b16 %v750, %v748
        %v775 = vpack.c.b16 %v751, %v749
        %v776 = vpack.c.b16 %v754, %v752
        %v777 = vpack.c.b16 %v755, %v753
        %v778 = vpack.c.b16 %v758, %v756
        %v779 = vpack.c.b16 %v759, %v757
        %v780 = vpack.c.b16 %v762, %v760
        %v781 = vpack.c.b16 %v763, %v761
        %v782 = vpack.c.b16 %v766, %v764
        %v783 = vpack.c.b16 %v767, %v765
        %800 = vmatprep.subr.bf16.mxu0 %v769
        %801 = vmatpush1.bf16.msra.mxu0 %v768
        %802 = vmatprep.subr.bf16.mxu0 %v771
        %803 = vmatpush1.bf16.msra.mxu0 %v770
        %804 = vmatprep.subr.bf16.mxu0 %v773
        %805 = vmatpush1.bf16.msra.mxu0 %v772
        %806 = vmatprep.subr.bf16.mxu0 %v775
        %807 = vmatpush1.bf16.msra.mxu0 %v774
        %808 = vmatprep.subr.bf16.mxu0 %v777
        %809 = vmatpush1.bf16.msra.mxu0 %v776
        %810 = vmatprep.subr.bf16.mxu0 %v779
        %811 = vmatpush1.bf16.msra.mxu0 %v778
        %812 = vmatprep.subr.bf16.mxu0 %v781
        %813 = vmatpush1.bf16.msra.mxu0 %v780
        %814 = vmatprep.subr.bf16.mxu0 %v783
        %815 = vmatpush1.bf16.msra.mxu0 %v782
        %816 = vmatprep.subr.bf16.mxu0 0
        %817 = vmatpush1.bf16.msra.mxu0 0
        %818 = vmatprep.subr.bf16.mxu0 0
        %819 = vmatpush1.bf16.msra.mxu0 0
        %820 = vmatprep.subr.bf16.mxu0 0
        %821 = vmatpush1.bf16.msra.mxu0 0
        %822 = vmatprep.subr.bf16.mxu0 0
        %823 = vmatpush1.bf16.msra.mxu0 0
        %824 = vmatprep.subr.bf16.mxu0 0
        %825 = vmatpush1.bf16.msra.mxu0 0
        %826 = vmatprep.subr.bf16.mxu0 0
        %827 = vmatpush1.bf16.msra.mxu0 0
        %828 = vmatprep.subr.bf16.mxu0 0
        %829 = vmatpush1.bf16.msra.mxu0 0
        %830 = vmatprep.subr.bf16.mxu0 0
        %831 = vmatpush1.bf16.msra.mxu0 0
        %832 = vmatprep.mubr.bf16.mxu0 0
        %833 = vmatmul.mubr.bf16.gmra.mrb[0].mxu0 %v688
        %v834 = vpop.f32.mrb[0].mxu0
        %v835 = vadd.f32 %v713, %v834
        %v836 = vpop.f32.mrb[0].mxu0
        %v837 = vadd.f32 %v717, %v836
        %v838 = vpop.f32.mrb[0].mxu0
        %v839 = vadd.f32 %v713, %v838
        %v840 = vpop.f32.mrb[0].mxu0
        %v841 = vadd.f32 %v717, %v840
        %842 = vmatprep.mubr.bf16.mxu0 0
        %843 = vmatmul.mubr.bf16.gmra.mrb[0].mxu0 %v689
        %v844 = vpop.f32.mrb[0].mxu0
        %v845 = vadd.f32 %v713, %v844
        %v846 = vpop.f32.mrb[0].mxu0
        %v847 = vadd.f32 %v717, %v846
        %v848 = vpop.f32.mrb[0].mxu0
        %v849 = vadd.f32 %v713, %v848
        %v850 = vpop.f32.mrb[0].mxu0
        %v851 = vadd.f32 %v717, %v850
        %852 = vmatprep.mubr.bf16.mxu0 0
        %853 = vmatmul.mubr.bf16.gmra.mrb[0].mxu0 %v690
        %v854 = vpop.f32.mrb[0].mxu0
        %v855 = vadd.f32 %v713, %v854
        %v856 = vpop.f32.mrb[0].mxu0
        %v857 = vadd.f32 %v717, %v856
        %v858 = vpop.f32.mrb[0].mxu0
        %v859 = vadd.f32 %v713, %v858
        %v860 = vpop.f32.mrb[0].mxu0
        %v861 = vadd.f32 %v717, %v860
        %862 = vmatprep.mubr.bf16.mxu0 0
        %863 = vmatmul.mubr.bf16.gmra.mrb[0].mxu0 %v691
        %v864 = vpop.f32.mrb[0].mxu0
        %v865 = vadd.f32 %v713, %v864
        %v866 = vpop.f32.mrb[0].mxu0
        %v867 = vadd.f32 %v717, %v866
        %v868 = vpop.f32.mrb[0].mxu0
        %v869 = vadd.f32 %v713, %v868
        %v870 = vpop.f32.mrb[0].mxu0
        %v871 = vadd.f32 %v717, %v870
        %872 = vdwg.mxu0
        %v873 = vmul.f32 %v835, %v835
        %v874 = vmul.f32 %v837, %v837
        %v875 = vmul.f32 %v839, %v839
        %v876 = vmul.f32 %v841, %v841
        %v877 = vmul.f32 %v845, %v845
        %v878 = vmul.f32 %v847, %v847
        %v879 = vmul.f32 %v849, %v849
        %v880 = vmul.f32 %v851, %v851
        %v881 = vmul.f32 %v855, %v855
        %v882 = vmul.f32 %v857, %v857
        %v883 = vmul.f32 %v859, %v859
        %v884 = vmul.f32 %v861, %v861
        %v885 = vmul.f32 %v865, %v865
        %v886 = vmul.f32 %v867, %v867
        %v887 = vmul.f32 %v869, %v869
        %v888 = vmul.f32 %v871, %v871
        %v889 = vmul.f32 %v835, %v873
        %v890 = vmul.f32 %v837, %v874
        %v891 = vmul.f32 %v839, %v875
        %v892 = vmul.f32 %v841, %v876
        %v893 = vmul.f32 %v845, %v877
        %v894 = vmul.f32 %v847, %v878
        %v895 = vmul.f32 %v849, %v879
        %v896 = vmul.f32 %v851, %v880
        %v897 = vmul.f32 %v855, %v881
        %v898 = vmul.f32 %v857, %v882
        %v899 = vmul.f32 %v859, %v883
        %v900 = vmul.f32 %v861, %v884
        %v901 = vmul.f32 %v865, %v885
        %v902 = vmul.f32 %v867, %v886
        %v903 = vmul.f32 %v869, %v887
        %v904 = vmul.f32 %v871, %v888
        %v905 = vmul.f32 %v889, 0.044715
        %v906 = vmul.f32 %v890, 0.044715
        %v907 = vmul.f32 %v891, 0.044715
        %v908 = vmul.f32 %v892, 0.044715
        %v909 = vmul.f32 %v893, 0.044715
        %v910 = vmul.f32 %v894, 0.044715
        %v911 = vmul.f32 %v895, 0.044715
        %v912 = vmul.f32 %v896, 0.044715
        %v913 = vmul.f32 %v897, 0.044715
        %v914 = vmul.f32 %v898, 0.044715
        %v915 = vmul.f32 %v899, 0.044715
        %v916 = vmul.f32 %v900, 0.044715
        %v917 = vmul.f32 %v901, 0.044715
        %v918 = vmul.f32 %v902, 0.044715
        %v919 = vmul.f32 %v903, 0.044715
        %v920 = vmul.f32 %v904, 0.044715
        %v921 = vadd.f32 %v835, %v905
        %v922 = vadd.f32 %v837, %v906
        %v923 = vadd.f32 %v839, %v907
        %v924 = vadd.f32 %v841, %v908
        %v925 = vadd.f32 %v845, %v909
        %v926 = vadd.f32 %v847, %v910
        %v927 = vadd.f32 %v849, %v911
        %v928 = vadd.f32 %v851, %v912
        %v929 = vadd.f32 %v855, %v913
        %v930 = vadd.f32 %v857, %v914
        %v931 = vadd.f32 %v859, %v915
        %v932 = vadd.f32 %v861, %v916
        %v933 = vadd.f32 %v865, %v917
        %v934 = vadd.f32 %v867, %v918
        %v935 = vadd.f32 %v869, %v919
        %v936 = vadd.f32 %v871, %v920
        %v937 = vmul.f32 %v921, 0.7978846
        %v938 = vmul.f32 %v922, 0.7978846
        %v939 = vmul.f32 %v923, 0.7978846
        %v940 = vmul.f32 %v924, 0.7978846
        %v941 = vmul.f32 %v925, 0.7978846
        %v942 = vmul.f32 %v926, 0.7978846
        %v943 = vmul.f32 %v927, 0.7978846
        %v944 = vmul.f32 %v928, 0.7978846
        %v945 = vmul.f32 %v929, 0.7978846
        %v946 = vmul.f32 %v930, 0.7978846
        %v947 = vmul.f32 %v931, 0.7978846
        %v948 = vmul.f32 %v932, 0.7978846
        %v949 = vmul.f32 %v933, 0.7978846
        %v950 = vmul.f32 %v934, 0.7978846
        %v951 = vmul.f32 %v935, 0.7978846
        %v952 = vmul.f32 %v936, 0.7978846
        %v953 = vtanh.pop %v937
        %v954 = vtanh.pop %v938
        %v955 = vtanh.pop %v939
        %v956 = vtanh.pop %v940
        %v957 = vtanh.pop %v941
        %v958 = vtanh.pop %v942
        %v959 = vtanh.pop %v943
        %v960 = vtanh.pop %v944
        %v961 = vtanh.pop %v945
        %v962 = vtanh.pop %v946
        %v963 = vtanh.pop %v947
        %v964 = vtanh.pop %v948
        %v965 = vtanh.pop %v949
        %v966 = vtanh.pop %v950
        %v967 = vtanh.pop %v951
        %v968 = vtanh.pop %v952
        %v969 = vadd.f32 %v953, 1.0
        %v970 = vadd.f32 %v954, 1.0
        %v971 = vadd.f32 %v955, 1.0
        %v972 = vadd.f32 %v956, 1.0
        %v973 = vadd.f32 %v957, 1.0
        %v974 = vadd.f32 %v958, 1.0
        %v975 = vadd.f32 %v959, 1.0
        %v976 = vadd.f32 %v960, 1.0
        %v977 = vadd.f32 %v961, 1.0
        %v978 = vadd.f32 %v962, 1.0
        %v979 = vadd.f32 %v963, 1.0
        %v980 = vadd.f32 %v964, 1.0
        %v981 = vadd.f32 %v965, 1.0
        %v982 = vadd.f32 %v966, 1.0
        %v983 = vadd.f32 %v967, 1.0
        %v984 = vadd.f32 %v968, 1.0
        %v985 = vmul.f32 %v969, 0.5
        %v986 = vmul.f32 %v970, 0.5
        %v987 = vmul.f32 %v971, 0.5
        %v988 = vmul.f32 %v972, 0.5
        %v989 = vmul.f32 %v973, 0.5
        %v990 = vmul.f32 %v974, 0.5
        %v991 = vmul.f32 %v975, 0.5
        %v992 = vmul.f32 %v976, 0.5
        %v993 = vmul.f32 %v977, 0.5
        %v994 = vmul.f32 %v978, 0.5
        %v995 = vmul.f32 %v979, 0.5
        %v996 = vmul.f32 %v980, 0.5
        %v997 = vmul.f32 %v981, 0.5
        %v998 = vmul.f32 %v982, 0.5
        %v999 = vmul.f32 %v983, 0.5
        %v1000 = vmul.f32 %v984, 0.5
        %v1001 = vmul.f32 %v835, %v985
        %v1002 = vmul.f32 %v837, %v986
        %v1003 = vmul.f32 %v839, %v987
        %v1004 = vmul.f32 %v841, %v988
        %v1005 = vmul.f32 %v845, %v989
        %v1006 = vmul.f32 %v847, %v990
        %v1007 = vmul.f32 %v849, %v991
        %v1008 = vmul.f32 %v851, %v992
        %v1009 = vmul.f32 %v855, %v993
        %v1010 = vmul.f32 %v857, %v994
        %v1011 = vmul.f32 %v859, %v995
        %v1012 = vmul.f32 %v861, %v996
        %v1013 = vmul.f32 %v865, %v997
        %v1014 = vmul.f32 %v867, %v998
        %v1015 = vmul.f32 %v869, %v999
        %v1016 = vmul.f32 %v871, %v1000
        %v1017 = vpack.c.bf16 %v1003, %v1001
        %v1018 = vpack.c.bf16 %v1004, %v1002
        %v1019 = vpack.c.bf16 %v1007, %v1005
        %v1020 = vpack.c.bf16 %v1008, %v1006
        %v1021 = vpack.c.bf16 %v1011, %v1009
        %v1022 = vpack.c.bf16 %v1012, %v1010
        %v1023 = vpack.c.bf16 %v1015, %v1013
        %v1024 = vpack.c.bf16 %v1016, %v1014
        %v1025 = vld [vmem:[%s6] sm:$0xf]
        %v1026 = vld [vmem:[%s6 + $0x4] sm:$0xf]
        %v1027 = vld [vmem:[%s6 + $0x8] sm:$0xf]
        %v1028 = vld [vmem:[%s6 + $0xc] sm:$0xf]
        %v1029 = vld [vmem:[%s6 + $0x10] sm:$0xf]
        %v1030 = vld [vmem:[%s6 + $0x14] sm:$0xf]
        %v1031 = vld [vmem:[%s6 + $0x18] sm:$0xf]
        %v1032 = vld [vmem:[%s6 + $0x1c] sm:$0xf]
        %v1033 = vld [vmem:[%s6 + $0x20] sm:$0xf]
        %v1034 = vld [vmem:[%s6 + $0x24] sm:$0xf]
        %v1035 = vld [vmem:[%s6 + $0x28] sm:$0xf]
        %v1036 = vld [vmem:[%s6 + $0x2c] sm:$0xf]
        %v1037 = vld [vmem:[%s6 + $0x30] sm:$0xf]
        %v1038 = vld [vmem:[%s6 + $0x34] sm:$0xf]
        %v1039 = vld [vmem:[%s6 + $0x38] sm:$0xf]
        %v1040 = vld [vmem:[%s6 + $0x3c] sm:$0xf]
        %v1041 = vld [vmem:[%s6 + $0x40] sm:$0xf]
        %v1042 = vld [vmem:[%s6 + $0x44] sm:$0xf]
        %v1043 = vld [vmem:[%s6 + $0x48] sm:$0xf]
        %v1044 = vld [vmem:[%s6 + $0x4c] sm:$0xf]
        %v1045 = vld [vmem:[%s6 + $0x50] sm:$0xf]
        %v1046 = vld [vmem:[%s6 + $0x54] sm:$0xf]
        %v1047 = vld [vmem:[%s6 + $0x58] sm:$0xf]
        %v1048 = vld [vmem:[%s6 + $0x5c] sm:$0xf]
        %v1049 = vld [vmem:[%s6 + $0x60] sm:$0xf]
        %v1050 = vld [vmem:[%s6 + $0x64] sm:$0xf]
        %v1051 = vld [vmem:[%s6 + $0x68] sm:$0xf]
        %v1052 = vld [vmem:[%s6 + $0x6c] sm:$0xf]
        %v1053 = vld [vmem:[%s6 + $0x70] sm:$0xf]
        %v1054 = vld [vmem:[%s6 + $0x74] sm:$0xf]
        %v1055 = vld [vmem:[%s6 + $0x78] sm:$0xf]
        %v1056 = vld [vmem:[%s6 + $0x7c] sm:$0xf]
        %v1089 = vunpack.c.l.b16 %v1025
        %v1090 = vunpack.c.l.b16 %v1026
        %v1091 = vunpack.c.l.b16 %v1027
        %v1092 = vunpack.c.l.b16 %v1028
        %v1093 = vunpack.c.l.b16 %v1029
        %v1094 = vunpack.c.l.b16 %v1030
        %v1095 = vunpack.c.l.b16 %v1031
        %v1096 = vunpack.c.l.b16 %v1032
        %v1097 = vunpack.c.l.b16 %v1033
        %v1098 = vunpack.c.l.b16 %v1034
        %v1099 = vunpack.c.l.b16 %v1035
        %v1100 = vunpack.c.l.b16 %v1036
        %v1101 = vunpack.c.l.b16 %v1037
        %v1102 = vunpack.c.l.b16 %v1038
        %v1103 = vunpack.c.l.b16 %v1039
        %v1104 = vunpack.c.l.b16 %v1040
        %v1105 = vunpack.c.l.b16 %v1041
        %v1106 = vunpack.c.l.b16 %v1042
        %v1107 = vunpack.c.l.b16 %v1043
        %v1108 = vunpack.c.l.b16 %v1044
        %v1109 = vunpack.c.l.b16 %v1045
        %v1110 = vunpack.c.l.b16 %v1046
        %v1111 = vunpack.c.l.b16 %v1047
        %v1112 = vunpack.c.l.b16 %v1048
        %v1113 = vunpack.c.l.b16 %v1049
        %v1114 = vunpack.c.l.b16 %v1050
        %v1115 = vunpack.c.l.b16 %v1051
        %v1116 = vunpack.c.l.b16 %v1052
        %v1117 = vunpack.c.l.b16 %v1053
        %v1118 = vunpack.c.l.b16 %v1054
        %v1119 = vunpack.c.l.b16 %v1055
        %v1120 = vunpack.c.l.b16 %v1056
        %v1121 = vpack.c.b16 %v1090, %v1089
        %v1122 = vpack.c.b16 %v1092, %v1091
        %v1123 = vpack.c.b16 %v1094, %v1093
        %v1124 = vpack.c.b16 %v1096, %v1095
        %v1125 = vpack.c.b16 %v1098, %v1097
        %v1126 = vpack.c.b16 %v1100, %v1099
        %v1127 = vpack.c.b16 %v1102, %v1101
        %v1128 = vpack.c.b16 %v1104, %v1103
        %v1129 = vpack.c.b16 %v1106, %v1105
        %v1130 = vpack.c.b16 %v1108, %v1107
        %v1131 = vpack.c.b16 %v1110, %v1109
        %v1132 = vpack.c.b16 %v1112, %v1111
        %v1133 = vpack.c.b16 %v1114, %v1113
        %v1134 = vpack.c.b16 %v1116, %v1115
        %v1135 = vpack.c.b16 %v1118, %v1117
        %v1136 = vpack.c.b16 %v1120, %v1119
        %1153 = vmatprep.subr.bf16.mxu0 0
        %1154 = vmatpush1.bf16.msra.mxu0 %v1121
        %1155 = vmatprep.subr.bf16.mxu0 0
        %1156 = vmatpush1.bf16.msra.mxu0 %v1122
        %1157 = vmatprep.subr.bf16.mxu0 0
        %1158 = vmatpush1.bf16.msra.mxu0 %v1123
        %1159 = vmatprep.subr.bf16.mxu0 0
        %1160 = vmatpush1.bf16.msra.mxu0 %v1124
        %1161 = vmatprep.subr.bf16.mxu0 0
        %1162 = vmatpush1.bf16.msra.mxu0 %v1125
        %1163 = vmatprep.subr.bf16.mxu0 0
        %1164 = vmatpush1.bf16.msra.mxu0 %v1126
        %1165 = vmatprep.subr.bf16.mxu0 0
        %1166 = vmatpush1.bf16.msra.mxu0 %v1127
        %1167 = vmatprep.subr.bf16.mxu0 0
        %1168 = vmatpush1.bf16.msra.mxu0 %v1128
        %1169 = vmatprep.subr.bf16.mxu0 0
        %1170 = vmatpush1.bf16.msra.mxu0 %v1129
        %1171 = vmatprep.subr.bf16.mxu0 0
        %1172 = vmatpush1.bf16.msra.mxu0 %v1130
        %1173 = vmatprep.subr.bf16.mxu0 0
        %1174 = vmatpush1.bf16.msra.mxu0 %v1131
        %1175 = vmatprep.subr.bf16.mxu0 0
        %1176 = vmatpush1.bf16.msra.mxu0 %v1132
        %1177 = vmatprep.subr.bf16.mxu0 0
        %1178 = vmatpush1.bf16.msra.mxu0 %v1133
        %1179 = vmatprep.subr.bf16.mxu0 0
        %1180 = vmatpush1.bf16.msra.mxu0 %v1134
        %1181 = vmatprep.subr.bf16.mxu0 0
        %1182 = vmatpush1.bf16.msra.mxu0 %v1135
        %1183 = vmatprep.subr.bf16.mxu0 0
        %1184 = vmatpush1.bf16.msra.mxu0 %v1136
        %1185 = vmatprep.mubr.bf16.mxu0 %v1018
        %1186 = vmatmul.mubr.bf16.gmra.mrb[0].mxu0 %v1017
        %v1187 = vpop.f32.mrb[0].mxu0
        %v1188 = vadd.f32 0.0, %v1187
        %v1189 = vpop.f32.mrb[0].mxu0
        %v1190 = vpop.f32.mrb[0].mxu0
        %v1191 = vadd.f32 0.0, %v1190
        %v1192 = vpop.f32.mrb[0].mxu0
        %1193 = vmatprep.mubr.bf16.mxu0 %v1020
        %1194 = vmatmul.mubr.bf16.gmra.mrb[0].mxu0 %v1019
        %v1195 = vpop.f32.mrb[0].mxu0
        %v1196 = vadd.f32 0.0, %v1195
        %v1197 = vpop.f32.mrb[0].mxu0
        %v1198 = vpop.f32.mrb[0].mxu0
        %v1199 = vadd.f32 0.0, %v1198
        %v1200 = vpop.f32.mrb[0].mxu0
        %1201 = vmatprep.mubr.bf16.mxu0 %v1022
        %1202 = vmatmul.mubr.bf16.gmra.mrb[0].mxu0 %v1021
        %v1203 = vpop.f32.mrb[0].mxu0
        %v1204 = vadd.f32 0.0, %v1203
        %v1205 = vpop.f32.mrb[0].mxu0
        %v1206 = vpop.f32.mrb[0].mxu0
        %v1207 = vadd.f32 0.0, %v1206
        %v1208 = vpop.f32.mrb[0].mxu0
        %1209 = vmatprep.mubr.bf16.mxu0 %v1024
        %1210 = vmatmul.mubr.bf16.gmra.mrb[0].mxu0 %v1023
        %v1211 = vpop.f32.mrb[0].mxu0
        %v1212 = vadd.f32 0.0, %v1211
        %v1213 = vpop.f32.mrb[0].mxu0
        %v1214 = vpop.f32.mrb[0].mxu0
        %v1215 = vadd.f32 0.0, %v1214
        %v1216 = vpop.f32.mrb[0].mxu0
        %1217 = vdwg.mxu0
        %v1218 = vadd.f32 %v680, %v1188
        %v1219 = vadd.f32 %v681, %v1191
        %v1220 = vadd.f32 %v682, %v1196
        %v1221 = vadd.f32 %v683, %v1199
        %v1222 = vadd.f32 %v684, %v1204
        %v1223 = vadd.f32 %v685, %v1207
        %v1224 = vadd.f32 %v686, %v1212
        %v1225 = vadd.f32 %v687, %v1215
        %v1226 = vld [vmem:[%s7] sm:$0x1]
        %v1228 = vlaneseq
        %v1229 = vshrl.u32 %v1228, 7
        %v1230 = vsub.s32 0, %v1229
        %v1231 = vrot.slane %v1226, %v1230
        %v1233 = vadd.f32 %v1218, %v1231
        %v1234 = vadd.f32 %v1219, %v1231
        %v1235 = vadd.f32 %v1220, %v1231
        %v1236 = vadd.f32 %v1221, %v1231
        %v1237 = vadd.f32 %v1222, %v1231
        %v1238 = vadd.f32 %v1223, %v1231
        %v1239 = vadd.f32 %v1224, %v1231
        %v1240 = vadd.f32 %v1225, %v1231
        %v1241 = vld [vmem:[%s8] sm:$0x1]
        %v1243 = vlaneseq
        %v1244 = vshrl.u32 %v1243, 7
        %v1245 = vsub.s32 0, %v1244
        %v1246 = vrot.slane %v1241, %v1245
        %v1248 = vmul.f32 %v1233, %v1246
        %v1249 = vmul.f32 %v1234, %v1246
        %v1250 = vmul.f32 %v1235, %v1246
        %v1251 = vmul.f32 %v1236, %v1246
        %v1252 = vmul.f32 %v1237, %v1246
        %v1253 = vmul.f32 %v1238, %v1246
        %v1254 = vmul.f32 %v1239, %v1246
        %v1255 = vmul.f32 %v1240, %v1246
        %1256 = vadd.xlane.f32.xlu0 %v1248
        %v1257 = vpop.xlane.xlu0 %1256
        %1258 = vadd.xlane.f32.xlu0 %v1249
        %v1259 = vpop.xlane.xlu0 %1258
        %1260 = vadd.xlane.f32.xlu0 %v1250
        %v1261 = vpop.xlane.xlu0 %1260
        %1262 = vadd.xlane.f32.xlu0 %v1251
        %v1263 = vpop.xlane.xlu0 %1262
        %1264 = vadd.xlane.f32.xlu0 %v1252
        %v1265 = vpop.xlane.xlu0 %1264
        %1266 = vadd.xlane.f32.xlu0 %v1253
        %v1267 = vpop.xlane.xlu0 %1266
        %1268 = vadd.xlane.f32.xlu0 %v1254
        %v1269 = vpop.xlane.xlu0 %1268
        %1270 = vadd.xlane.f32.xlu0 %v1255
        %v1271 = vpop.xlane.xlu0 %1270
        %v1272 = vld [vmem:[#allocation2] sm:$0x1]
        %v1274 = vlaneseq
        %v1275 = vshrl.u32 %v1274, 7
        %v1276 = vsub.s32 0, %v1275
        %v1277 = vrot.slane %v1272, %v1276
        %v1279 = vadd.f32 %v1257, %v1277
        %v1280 = vadd.f32 %v1259, %v1277
        %v1281 = vadd.f32 %v1261, %v1277
        %v1282 = vadd.f32 %v1263, %v1277
        %v1283 = vadd.f32 %v1265, %v1277
        %v1284 = vadd.f32 %v1267, %v1277
        %v1285 = vadd.f32 %v1269, %v1277
        %v1286 = vadd.f32 %v1271, %v1277
        %v1287 = vld [vmem:[%s471] sm:$0xff]
        %v1288 = vld [vmem:[%s471 + $0x8] sm:$0xff]
        %v1289 = vld [vmem:[%s471 + $0x10] sm:$0xff]
        %v1290 = vld [vmem:[%s471 + $0x18] sm:$0xff]
        %v1291 = vld [vmem:[%s488] sm:$0xff]
        %v1292 = vld [vmem:[%s488 + $0x8] sm:$0xff]
        %v1293 = vld [vmem:[%s488 + $0x10] sm:$0xff]
        %v1294 = vld [vmem:[%s488 + $0x18] sm:$0xff]
        %v1295 = vld [vmem:[%s493] sm:$0xff]
        %v1296 = vld [vmem:[%s493 + $0x8] sm:$0xff]
        %v1297 = vld [vmem:[%s493 + $0x10] sm:$0xff]
        %v1298 = vld [vmem:[%s493 + $0x18] sm:$0xff]
        %v1299 = vld [vmem:[%s493 + $0x20] sm:$0xff]
        %v1300 = vld [vmem:[%s493 + $0x28] sm:$0xff]
        %v1301 = vld [vmem:[%s493 + $0x30] sm:$0xff]
        %v1302 = vld [vmem:[%s493 + $0x38] sm:$0xff]
        %1304 = vset.pattern.permute.xlu0 0
        %1305 = vperm.xlu0 %1304, %v1279
        %v1306 = vpop.permute.xlu0 %1305
        %1309 = vset.pattern.permute.xlu0 0
        %1310 = vperm.xlu0 %1309, %v1280
        %v1311 = vpop.permute.xlu0 %1310
        %1314 = vset.pattern.permute.xlu0 0
        %1315 = vperm.xlu0 %1314, %v1281
        %v1316 = vpop.permute.xlu0 %1315
        %1319 = vset.pattern.permute.xlu0 0
        %1320 = vperm.xlu0 %1319, %v1282
        %v1321 = vpop.permute.xlu0 %1320
        %1324 = vset.pattern.permute.xlu0 0
        %1325 = vperm.xlu0 %1324, %v1283
        %v1326 = vpop.permute.xlu0 %1325
        %1329 = vset.pattern.permute.xlu0 0
        %1330 = vperm.xlu0 %1329, %v1284
        %v1331 = vpop.permute.xlu0 %1330
        %1334 = vset.pattern.permute.xlu0 0
        %1335 = vperm.xlu0 %1334, %v1285
        %v1336 = vpop.permute.xlu0 %1335
        %1339 = vset.pattern.permute.xlu0 0
        %1340 = vperm.xlu0 %1339, %v1286
        %v1341 = vpop.permute.xlu0 %1340
        %v1343 = vmul.f32 %v1306, %v1295
        %v1344 = vmul.f32 %v1311, %v1296
        %v1345 = vmul.f32 %v1316, %v1297
        %v1346 = vmul.f32 %v1321, %v1298
        %v1347 = vmul.f32 %v1326, %v1299
        %v1348 = vmul.f32 %v1331, %v1300
        %v1349 = vmul.f32 %v1336, %v1301
        %v1350 = vmul.f32 %v1341, %v1302
        %vm1351 = vcmask 523264
        %v1353 = vsel %vm1351, %v1291, 0
        %v1356 = vsel %vm1351, %v1292, 0
        %v1359 = vsel %vm1351, %v1293, 0
        %v1362 = vsel %vm1351, %v1294, 0
        %1364 = vmatprep.subr.mxu0 0.0
        %1365 = vmatpush1.msra.mxu0 %v1343
        %1366 = vmatprep.subr.mxu0 0.0
        %1367 = vmatpush1.msra.mxu0 %v1344
        %1368 = vmatprep.subr.mxu0 0.0
        %1369 = vmatpush1.msra.mxu0 %v1345
        %1370 = vmatprep.subr.mxu0 0.0
        %1371 = vmatpush1.msra.mxu0 %v1346
        %1372 = vmatprep.subr.mxu0 0.0
        %1373 = vmatpush1.msra.mxu0 %v1347
        %1374 = vmatprep.subr.mxu0 0.0
        %1375 = vmatpush1.msra.mxu0 %v1348
        %1376 = vmatprep.subr.mxu0 0.0
        %1377 = vmatpush1.msra.mxu0 %v1349
        %1378 = vmatprep.subr.mxu0 0.0
        %1379 = vmatpush1.msra.mxu0 %v1350
        %1380 = vmatprep.subr.mxu0 0.0
        %1381 = vmatpush1.msra.mxu0 0.0
        %1382 = vmatprep.subr.mxu0 0.0
        %1383 = vmatpush1.msra.mxu0 0.0
        %1384 = vmatprep.subr.mxu0 0.0
        %1385 = vmatpush1.msra.mxu0 0.0
        %1386 = vmatprep.subr.mxu0 0.0
        %1387 = vmatpush1.msra.mxu0 0.0
        %1388 = vmatprep.subr.mxu0 0.0
        %1389 = vmatpush1.msra.mxu0 0.0
        %1390 = vmatprep.subr.mxu0 0.0
        %1391 = vmatpush1.msra.mxu0 0.0
        %1392 = vmatprep.subr.mxu0 0.0
        %1393 = vmatpush1.msra.mxu0 0.0
        %1394 = vmatprep.subr.mxu0 0.0
        %1395 = vmatpush1.msra.mxu0 0.0
        %1396 = vmatprep.subr.mxu0 0.0
        %1397 = vmatpush1.msra.mxu0 0.0
        %1398 = vmatprep.subr.mxu0 0.0
        %1399 = vmatpush1.msra.mxu0 0.0
        %1400 = vmatprep.subr.mxu0 0.0
        %1401 = vmatpush1.msra.mxu0 0.0
        %1402 = vmatprep.subr.mxu0 0.0
        %1403 = vmatpush1.msra.mxu0 0.0
        %1404 = vmatprep.subr.mxu0 0.0
        %1405 = vmatpush1.msra.mxu0 0.0
        %1406 = vmatprep.subr.mxu0 0.0
        %1407 = vmatpush1.msra.mxu0 0.0
        %1408 = vmatprep.subr.mxu0 0.0
        %1409 = vmatpush1.msra.mxu0 0.0
        %1410 = vmatprep.subr.mxu0 0.0
        %1411 = vmatpush1.msra.mxu0 0.0
        %1412 = vmatprep.subr.mxu0 0.0
        %1413 = vmatpush1.msra.mxu0 0.0
        %1414 = vmatprep.subr.mxu0 0.0
        %1415 = vmatpush1.msra.mxu0 0.0
        %1416 = vmatprep.subr.mxu0 0.0
        %1417 = vmatpush1.msra.mxu0 0.0
        %1418 = vmatprep.subr.mxu0 0.0
        %1419 = vmatpush1.msra.mxu0 0.0
        %1420 = vmatprep.subr.mxu0 0.0
        %1421 = vmatpush1.msra.mxu0 0.0
        %1422 = vmatprep.subr.mxu0 0.0
        %1423 = vmatpush1.msra.mxu0 0.0
        %1424 = vmatprep.subr.mxu0 0.0
        %1425 = vmatpush1.msra.mxu0 0.0
        %1426 = vmatprep.subr.mxu0 0.0
        %1427 = vmatpush1.msra.mxu0 0.0
        %1428 = vmatprep.mubr.f32.mxu0 0.0
        %1429 = vmatmul.mubr.f32.gmra.mrb[0].mxu0 %v1353
        %v1430 = vpop.f32.mrb[0].mxu0
        %v1431 = vadd.f32 0.0, %v1430
        %v1432 = vpop.f32.mrb[0].mxu0
        %1433 = vmatprep.mubr.f32.mxu0 0.0
        %1434 = vmatmul.mubr.f32.gmra.mrb[0].mxu0 %v1356
        %v1435 = vpop.f32.mrb[0].mxu0
        %v1436 = vadd.f32 0.0, %v1435
        %v1437 = vpop.f32.mrb[0].mxu0
        %1438 = vmatprep.mubr.f32.mxu0 0.0
        %1439 = vmatmul.mubr.f32.gmra.mrb[0].mxu0 %v1359
        %v1440 = vpop.f32.mrb[0].mxu0
        %v1441 = vadd.f32 0.0, %v1440
        %v1442 = vpop.f32.mrb[0].mxu0
        %1443 = vmatprep.mubr.f32.mxu0 0.0
        %1444 = vmatmul.mubr.f32.gmra.mrb[0].mxu0 %v1362
        %v1445 = vpop.f32.mrb[0].mxu0
        %v1446 = vadd.f32 0.0, %v1445
        %v1447 = vpop.f32.mrb[0].mxu0
        %1448 = vdwg.mxu0
        %v1449 = vadd.f32 %v1287, %v1431
        %v1450 = vadd.f32 %v1288, %v1436
        %v1451 = vadd.f32 %v1289, %v1441
        %v1452 = vadd.f32 %v1290, %v1446
        %vm1453 = vcmask 261120
        %1454 = vst.msk [vmem:[%s471] sm:$0xff] %vm1453, %v1449
        %1455 = vst.msk [vmem:[%s471 + $0x8] sm:$0xff] %vm1453, %v1450
        %1456 = vst.msk [vmem:[%s471 + $0x10] sm:$0xff] %vm1453, %v1451
        %1457 = vst.msk [vmem:[%s471 + $0x18] sm:$0xff] %vm1453, %v1452
        %s1458 = sand.u32 %s322, 1
        %s1459 = scalar_lea.sflag [#allocation4], %s1458
        %s1460 = sand.u32 %s322, 1
        %s1461 = smul.addr %s1460, 32
        %s1462 = scalar_lea.vmem [#allocation3], %s1461
        // Predicated region
        $region73: #{sam_finetuner_forward.1} parent=67 // pred_check
          %p1463 = pneg %p332
        $region74: #{sam_finetuner_forward.1} parent=67 // pred_check_branch
          %1465 = sbr.rel (%p1463) target = $region76
        $region75: #{sam_finetuner_forward.1} parent=67 // pred_region
          %s1467 = ssub.s32 512, 512
          %1468 = vsyncadd %s1459, %s1467
          %s1469 = smul.addr %s32, 4
          %s1470 = smul.addr %s1469, 128
          %s1471 = scalar_lea.hbm %s12, %s1470
          %s1472 = sshll.u32 %s1462, 4
          %s1473 = int_to_ptr.vmem [resolvable:$true] %s1472
          %1478 = dma.vmem_to_hbm [thread:$0]  %s1473, 512, %s1471, %s1459, 128, 128, 8
        $region76: #{sam_finetuner_forward.1} parent=67 // pred_fallthru
          _
      $region68: #{sam_finetuner_forward.1} parent=5 // pred_fallthru
        _
      %p1479 = scmp.le.s32.totalorder 2, %s23
      // Predicated region
      $region77: #{sam_finetuner_forward.1} parent=5 // pred_check
        %p1480 = pneg %p1479
      $region78: #{sam_finetuner_forward.1} parent=5 // pred_check_branch
        %1482 = sbr.rel (%p1480) target = $region80
      $region79: #{sam_finetuner_forward.1} parent=5 // pred_region
        %s1483 = ssub.s32 %s23, 2
        // Predicated region
        $region81: #{sam_finetuner_forward.1} parent=79 // pred_check
          %p1484 = pneg %p338
        $region82: #{sam_finetuner_forward.1} parent=79 // pred_check_branch
          %1486 = sbr.rel (%p1484) target = $region84
        $region83: #{sam_finetuner_forward.1} parent=79 // pred_region
          %s1487 = sand.u32 %s323, 1
          %s1488 = scalar_lea.sflag [#allocation4], %s1487
          %s1489 = sand.u32 %s323, 1
          %s1490 = smul.addr %s1489, 32
          %s1491 = scalar_lea.vmem [#allocation3], %s1490
          %1492 = dma.done %s1488, 512
        $region84: #{sam_finetuner_forward.1} parent=79 // pred_fallthru
          _
      $region80: #{sam_finetuner_forward.1} parent=5 // pred_fallthru
        _
    $region6: #{sam_finetuner_forward.1} parent=1 // loop_footer
      %s27 = sadd.s32 1, %s23
    $region7: #{sam_finetuner_forward.1} parent=1 // loop_footer_branch
      %22 = sbr.rel target = $region3
    $region8: #{sam_finetuner_forward.1} parent=1 // loop_exit
      _
    %1493 = vsyncpa [#allocation4], 1
    %s1494 = scalar_lea.sflag [#allocation4], 1
    %1495 = vsyncpa %s1494, 1

</llo_original>
